<compile_context>
chip_gen: v7x
topology: tpu7x:2x2x1
jax: 0.10.0
libtpu: 0.0.40
codegen_flags: <defaults>
</compile_context>

<pallas_src>
import functools

import jax
import jax.numpy as jnp
from jax.experimental import pallas as pl
from jax.experimental.pallas import tpu as pltpu

EPS = 1e-5
_HIGHEST = jax.lax.Precision.HIGHEST


# ---------------------------------------------------------------------------
# Bilinear-interpolation helpers (match F.interpolate, align_corners=False).
# ---------------------------------------------------------------------------
def _interp_coords(out_size, in_size):
    i = jnp.arange(out_size, dtype=jnp.float32)
    src = jnp.clip((i + 0.5) * (in_size / out_size) - 0.5, 0.0, in_size - 1.0)
    i0 = jnp.floor(src).astype(jnp.int32)
    i1 = jnp.minimum(i0 + 1, in_size - 1)
    return i0, i1, src - i0.astype(jnp.float32)


def _interp_matrix(out_size, in_size):
    """Dense (out_size, in_size) bilinear interpolation operator (rows sum to 1)."""
    i0, i1, frac = _interp_coords(out_size, in_size)
    rows = jnp.arange(out_size)
    m = jnp.zeros((out_size, in_size), jnp.float32)
    m = m.at[rows, i0].add(1.0 - frac)
    m = m.at[rows, i1].add(frac)
    return m


# ---------------------------------------------------------------------------
# Fused PagFM Pallas kernel
# ---------------------------------------------------------------------------
def _pagfm_fused_kernel(x_ref, y_ref, rh_ref, rwt_ref,
                        wcc_ref, ba_ref, wb_ref, bb_ref,
                        o_ref, zw_scr):
    C, TH, WX = x_ref.shape            # x row tile   (C, TILE_H, W_hi)
    _, HY, WY = y_ref.shape            # low-res y    (C, H_lo, W_lo)
    i = pl.program_id(1)               # row-tile index (innermost grid axis)

    rwt = rwt_ref[...]                 # (W_lo, W_hi) column-interp, transposed

    # ---- once per batch (first row tile): low-res fold + width interpolation
    #      pass, written into a persistent VMEM scratch (H_lo, (2C+1)*W_hi).
    @pl.when(i == 0)
    def _():
        y_lo = [y_ref[c].astype(jnp.float32) for c in range(C)]

        def put(plane_idx, z):
            zw_scr[:, plane_idx * WX:(plane_idx + 1) * WX] = jnp.dot(
                z, rwt, preferred_element_type=jnp.float32)

        # A planes: f_x weights folded through the upsample and through f_y.
        for co in range(C):
            a = y_lo[0] * wcc_ref[0, co] + ba_ref[co]
            for ci in range(1, C):
                a = a + y_lo[ci] * wcc_ref[ci, co]
            put(co, a)
        # B plane: f_x bias folded through f_y + upsample.
        bpl = y_lo[0] * wb_ref[0] + bb_ref[0]
        for ci in range(1, C):
            bpl = bpl + y_lo[ci] * wb_ref[ci]
        put(C, bpl)
        # raw y planes (needed for the final blend).
        for c in range(C):
            put(C + 1 + c, y_lo[c])

    # ---- per row tile: ONE batched height-pass matmul over all 2C+1 planes.
    up_all = jnp.dot(rh_ref[...], zw_scr[...],
                     preferred_element_type=jnp.float32)   # (TILE_H, (2C+1)*W_hi)

    x_blk = [x_ref[c].astype(jnp.float32) for c in range(C)]

    s = up_all[:, C * WX:(C + 1) * WX]                      # Up(B)
    for c in range(C):
        s = s + x_blk[c] * up_all[:, c * WX:(c + 1) * WX]   # + x_c * Up(A_c)
    sim = jax.nn.sigmoid(s)
    one_minus = 1.0 - sim

    for c in range(C):
        y_up = up_all[:, (C + 1 + c) * WX:(C + 2 + c) * WX]
        o_ref[c] = (one_minus * x_blk[c] + sim * y_up).astype(o_ref.dtype)


# ---------------------------------------------------------------------------
# Tile sizing / VMEM budgeting
# ---------------------------------------------------------------------------
def _vmem_estimate(c, th, wx, hy, wy, n_planes, in_itemsize):
    f32 = 4
    xo = 2 * c * th * wx * in_itemsize * 2          # x tile + out tile, double-buffered
    y_buf = c * hy * wy * in_itemsize * 2
    interp = (th * hy + wy * wx) * f32 * 2
    scratch = hy * n_planes * wx * f32
    temps = (n_planes + 4) * th * wx * f32          # up_all + sim + live x/out temps
    return xo + y_buf + interp + scratch + temps


def _pick_tile_h(b, c, hx, wx, hy, wy, n_planes, in_itemsize,
                 target_pixels=128 * 1024, vmem_budget=40 * 1024 * 1024):
    """Largest multiple-of-8 divisor of hx fitting the pixel target and a VMEM
    budget sized for v7x (64 MiB/TC); keeps >=2 row tiles when batch==1 so both
    v7x TensorCores get work."""
    divs = [t for t in range(8, hx + 1, 8) if hx % t == 0]
    if not divs:
        return hx                                    # full-extent block, always legal
    ok = [t for t in divs
          if t * wx <= target_pixels
          and _vmem_estimate(c, t, wx, hy, wy, n_planes, in_itemsize) <= vmem_budget]
    if not ok:
        ok = [t for t in divs
              if _vmem_estimate(c, t, wx, hy, wy, n_planes, in_itemsize) <= vmem_budget]
    if not ok:
        ok = divs
    th = max(ok)
    if b < 2 and hx // th < 2:
        smaller = [t for t in ok if hx // t >= 2]
        if smaller:
            th = max(smaller)
    return th


@functools.partial(jax.jit, static_argnames=("tile_h",))
def pagfm_forward(x, y, wfx, bfx, wfy, bfy, tile_h=None):
    b, c, hx, wx = x.shape
    _, _, hy, wy = y.shape
    n_planes = 2 * c + 1

    th = tile_h if tile_h is not None else _pick_tile_h(
        b, c, hx, wx, hy, wy, n_planes, x.dtype.itemsize)
    assert hx % th == 0, "tile_h must divide H"

    # Fold f_x through the (linear) upsample and through f_y: the MID dimension
    # disappears into a (C x C) weight + biases applied at LOW resolution.
    wcc = jnp.einsum("cm,dm->cd", wfy, wfx, precision=_HIGHEST)   # (C_in, C_out)
    ba = jnp.einsum("cm,m->c", wfx, bfy, precision=_HIGHEST)      # (C,)
    wb = jnp.einsum("cm,m->c", wfy, bfx, precision=_HIGHEST)      # (C,)
    bb = jnp.sum(bfx * bfy).reshape(1)                            # (1,)

    rh = _interp_matrix(hx, hy)            # (H_hi, H_lo)
    rwt = _interp_matrix(wx, wy).T         # (W_lo, W_hi)

    vmem_need = _vmem_estimate(c, th, wx, hy, wy, n_planes, x.dtype.itemsize)
    vmem_limit = int(min(max(2 * vmem_need, 32 * 1024 * 1024), 64 * 1024 * 1024))

    smem = pl.BlockSpec(memory_space=pltpu.MemorySpace.SMEM)
    return pl.pallas_call(
        _pagfm_fused_kernel,
        out_shape=jax.ShapeDtypeStruct((b, c, hx, wx), x.dtype),
        grid_spec=pltpu.PrefetchScalarGridSpec(
            num_scalar_prefetch=0,
            grid=(b, hx // th),
            in_specs=[
                # x: one batch, all channels, TILE_H rows, full width
                pl.BlockSpec((None, c, th, wx), lambda bb_, i: (bb_, 0, i, 0)),
                # y: full low-res image for this batch (constant in i -> one DMA/batch)
                pl.BlockSpec((None, c, hy, wy), lambda bb_, i: (bb_, 0, 0, 0)),
                # row-interpolation rows for this tile
                pl.BlockSpec((th, hy), lambda bb_, i: (i, 0)),
                # column-interpolation matrix (transposed), whole thing
                pl.BlockSpec((wy, wx), lambda bb_, i: (0, 0)),
                # folded weights / biases -> SMEM scalars
                smem, smem, smem, smem,
            ],
            out_specs=pl.BlockSpec((None, c, th, wx), lambda bb_, i: (bb_, 0, i, 0)),
            scratch_shapes=[pltpu.VMEM((hy, n_planes * wx), jnp.float32)],
        ),
        compiler_params=pltpu.CompilerParams(
            dimension_semantics=("parallel", "arbitrary"),
            vmem_limit_bytes=vmem_limit,
        ),
    )(x, y, rh, rwt, wcc, ba, wb, bb)


# ---------------------------------------------------------------------------
# BN folding (eval mode) and a pure-JAX reference mirroring the PyTorch module.
# ---------------------------------------------------------------------------
def fold_bn(w, gamma, beta, mean, var):
    # w: (Cin, Cout); BN over Cout (eval mode, running stats)
    scale = gamma / jnp.sqrt(var + EPS)
    w_folded = (w * scale[None, :]).astype(jnp.float32)
    b_folded = (beta - mean * scale).astype(jnp.float32)      # (Cout,)
    return w_folded, b_folded


def bilinear_resize_nchw(x, out_h, out_w):
    _, _, h, w = x.shape
    h0, h1, hf = _interp_coords(out_h, h)
    w0, w1, wf = _interp_coords(out_w, w)
    rows = (x[:, :, h0, :] * (1.0 - hf)[None, None, :, None]
            + x[:, :, h1, :] * hf[None, None, :, None])
    return rows[:, :, :, w0] * (1.0 - wf) + rows[:, :, :, w1] * wf


def pagfm_reference(x, y, wfx, bfx, wfy, bfy):
    hx, wx = x.shape[2], x.shape[3]
    y_q = jnp.einsum("bchw,cm->bmhw", y, wfy,
                     precision=_HIGHEST) + bfy.reshape(1, -1, 1, 1)
    y_q = bilinear_resize_nchw(y_q, hx, wx)
    x_k = jnp.einsum("bchw,cm->bmhw", x, wfx,
                     precision=_HIGHEST) + bfx.reshape(1, -1, 1, 1)
    y_up = bilinear_resize_nchw(y, hx, wx)
    sim = jax.nn.sigmoid(jnp.sum(x_k * y_q, axis=1, keepdims=True))
    return (1.0 - sim) * x + sim * y_up


# ---------------------------------------------------------------------------
if __name__ == "__main__":
    B, C, MID = 2, 4, 8
    HX, WX = 16, 16
    HY, WY = 8, 8

    key = jax.random.PRNGKey(0)
    ks = jax.random.split(key, 12)

    x = jax.random.normal(ks[0], (B, C, HX, WX), jnp.float32)
    y = jax.random.normal(ks[1], (B, C, HY, WY), jnp.float32)

    # Conv1x1 weights, stored as (Cin, Cout) (PyTorch layout is (Cout, Cin, 1, 1))
    w_fx = 0.3 * jax.random.normal(ks[2], (C, MID), jnp.float32)
    w_fy = 0.3 * jax.random.normal(ks[3], (C, MID), jnp.float32)

    # BatchNorm parameters (eval mode running stats), deterministic
    g_fx = 1.0 + 0.1 * jax.random.normal(ks[4], (MID,), jnp.float32)
    be_fx = 0.1 * jax.random.normal(ks[5], (MID,), jnp.float32)
    rm_fx = 0.1 * jax.random.normal(ks[6], (MID,), jnp.float32)
    rv_fx = 0.5 + jax.random.uniform(ks[7], (MID,), jnp.float32)

    g_fy = 1.0 + 0.1 * jax.random.normal(ks[8], (MID,), jnp.float32)
    be_fy = 0.1 * jax.random.normal(ks[9], (MID,), jnp.float32)
    rm_fy = 0.1 * jax.random.normal(ks[10], (MID,), jnp.float32)
    rv_fy = 0.5 + jax.random.uniform(ks[11], (MID,), jnp.float32)

    wfx, bfx = fold_bn(w_fx, g_fx, be_fx, rm_fx, rv_fx)
    wfy, bfy = fold_bn(w_fy, g_fy, be_fy, rm_fy, rv_fy)

    ref = pagfm_reference(x, y, wfx, bfx, wfy, bfy)

    # Default (auto-picked) tile: whole image per batch at this small size.
    out = jax.block_until_ready(pagfm_forward(x, y, wfx, bfx, wfy, bfy))
    assert out.shape == (B, C, HX, WX)
    # Tolerance loosened vs. the Precision.HIGHEST reference since the kernel
    # uses default-precision MXU matmuls for the interpolation.
    assert jnp.allclose(out, ref, rtol=2e-2, atol=2e-2), "mismatch vs reference"

    # Explicit smaller tile to exercise the multi-row-tile path (scratch reuse
    # across row tiles under the 'arbitrary' inner grid axis).
    out_tiled = jax.block_until_ready(
        pagfm_forward(x, y, wfx, bfx, wfy, bfy, tile_h=8))
    assert jnp.allclose(out_tiled, ref, rtol=2e-2, atol=2e-2), "tiled mismatch"

    print("KERNEL_OK")
</pallas_src>

<mosaic_0001>
module attributes {stable_mosaic.version = 11 : i64} {
  func.func private @main(%arg0: i32) attributes {dimension_semantics = [#tpu.dimension_semantics<core_parallel>], iteration_bounds = array<i64: 2>, tpu.core_type = #tpu.core_type<sc_scalar_subcore>, window_params = []} {
    return
  }
}

module attributes {stable_mosaic.version = 11 : i64} {
  func.func private @main(%arg0: i32) attributes {dimension_semantics = [#tpu.dimension_semantics<core_parallel>], iteration_bounds = array<i64: 2>, tpu.core_type = #tpu.core_type<sc_scalar_subcore>, window_params = []} {
    return
  }
}

module attributes {stable_mosaic.version = 11 : i64} {
  func.func @_pagfm_fused_kernel(%arg0: i32, %arg1: i32, %arg2: memref<1x4x16x16xf32, #tpu.memory_space<vmem>>, %arg3: memref<1x4x8x8xf32, #tpu.memory_space<vmem>>, %arg4: memref<16x8xf32, #tpu.memory_space<vmem>>, %arg5: memref<8x16xf32, #tpu.memory_space<vmem>>, %arg6: memref<4x4xf32, #tpu.memory_space<smem>>, %arg7: memref<4xf32, #tpu.memory_space<smem>>, %arg8: memref<4xf32, #tpu.memory_space<smem>>, %arg9: memref<1xf32, #tpu.memory_space<smem>>, %arg10: memref<1x4x16x16xf32, #tpu.memory_space<vmem>>, %arg11: memref<8x144xf32, #tpu.memory_space<vmem>>) attributes {dimension_semantics = [#tpu.dimension_semantics<parallel>, #tpu.dimension_semantics<arbitrary>], iteration_bounds = array<i64: 2, 1>, scalar_prefetch = 0 : i64, scratch_operands = 1 : i64, tpu.core_type = #tpu.core_type<tc>, window_params = [{transform_indices = @transform_0, window_bounds = array<i64: 1, 4, 16, 16>}, {transform_indices = @transform_1, window_bounds = array<i64: 1, 4, 8, 8>}, {transform_indices = @transform_2, window_bounds = array<i64: 16, 8>}, {pipeline_mode = #tpu.pipeline_mode<synchronous>, transform_indices = @transform_3, window_bounds = array<i64: 8, 16>}, {transform_indices = @transform_4, window_bounds = array<i64: 4, 4>}, {transform_indices = @transform_5, window_bounds = array<i64: 4>}, {transform_indices = @transform_6, window_bounds = array<i64: 4>}, {transform_indices = @transform_7, window_bounds = array<i64: 1>}, {transform_indices = @transform_8, window_bounds = array<i64: 1, 4, 16, 16>}]} {
    %c0 = arith.constant 0 : index
    %c0_0 = arith.constant 0 : index
    %0 = vector.load %arg5[%c0, %c0_0] : memref<8x16xf32, #tpu.memory_space<vmem>>, vector<8x16xf32>
    %c0_i32 = arith.constant 0 : i32
    %1 = arith.cmpi eq, %arg1, %c0_i32 : i32
    %2 = arith.extui %1 : i1 to i32
    %c0_i32_1 = arith.constant 0 : i32
    %3 = arith.cmpi ne, %2, %c0_i32_1 : i32
    scf.if %3 {
      %c0_37 = arith.constant 0 : index
      %c0_38 = arith.constant 0 : index
      %c0_39 = arith.constant 0 : index
      %c0_40 = arith.constant 0 : index
      %63 = vector.load %arg3[%c0_37, %c0_38, %c0_39, %c0_40] : memref<1x4x8x8xf32, #tpu.memory_space<vmem>>, vector<1x1x8x8xf32>
      %64 = vector.shape_cast %63 : vector<1x1x8x8xf32> to vector<8x8xf32>
      %c0_41 = arith.constant 0 : index
      %c1_42 = arith.constant 1 : index
      %c0_43 = arith.constant 0 : index
      %c0_44 = arith.constant 0 : index
      %65 = vector.load %arg3[%c0_41, %c1_42, %c0_43, %c0_44] : memref<1x4x8x8xf32, #tpu.memory_space<vmem>>, vector<1x1x8x8xf32>
      %66 = vector.shape_cast %65 : vector<1x1x8x8xf32> to vector<8x8xf32>
      %c0_45 = arith.constant 0 : index
      %c2_46 = arith.constant 2 : index
      %c0_47 = arith.constant 0 : index
      %c0_48 = arith.constant 0 : index
      %67 = vector.load %arg3[%c0_45, %c2_46, %c0_47, %c0_48] : memref<1x4x8x8xf32, #tpu.memory_space<vmem>>, vector<1x1x8x8xf32>
      %68 = vector.shape_cast %67 : vector<1x1x8x8xf32> to vector<8x8xf32>
      %c0_49 = arith.constant 0 : index
      %c3_50 = arith.constant 3 : index
      %c0_51 = arith.constant 0 : index
      %c0_52 = arith.constant 0 : index
      %69 = vector.load %arg3[%c0_49, %c3_50, %c0_51, %c0_52] : memref<1x4x8x8xf32, #tpu.memory_space<vmem>>, vector<1x1x8x8xf32>
      %70 = vector.shape_cast %69 : vector<1x1x8x8xf32> to vector<8x8xf32>
      %c0_53 = arith.constant 0 : index
      %c0_54 = arith.constant 0 : index
      %71 = memref.load %arg6[%c0_53, %c0_54] : memref<4x4xf32, #tpu.memory_space<smem>>
      %72 = vector.broadcast %71 : f32 to vector<8x8xf32>
      %73 = arith.mulf %64, %72 : vector<8x8xf32>
      %c0_55 = arith.constant 0 : index
      %74 = memref.load %arg7[%c0_55] : memref<4xf32, #tpu.memory_space<smem>>
      %75 = vector.broadcast %74 : f32 to vector<8x8xf32>
      %76 = arith.addf %73, %75 : vector<8x8xf32>
      %c1_56 = arith.constant 1 : index
      %c0_57 = arith.constant 0 : index
      %77 = memref.load %arg6[%c1_56, %c0_57] : memref<4x4xf32, #tpu.memory_space<smem>>
      %78 = vector.broadcast %77 : f32 to vector<8x8xf32>
      %79 = arith.mulf %66, %78 : vector<8x8xf32>
      %80 = arith.addf %76, %79 : vector<8x8xf32>
      %c2_58 = arith.constant 2 : index
      %c0_59 = arith.constant 0 : index
      %81 = memref.load %arg6[%c2_58, %c0_59] : memref<4x4xf32, #tpu.memory_space<smem>>
      %82 = vector.broadcast %81 : f32 to vector<8x8xf32>
      %83 = arith.mulf %68, %82 : vector<8x8xf32>
      %84 = arith.addf %80, %83 : vector<8x8xf32>
      %c3_60 = arith.constant 3 : index
      %c0_61 = arith.constant 0 : index
      %85 = memref.load %arg6[%c3_60, %c0_61] : memref<4x4xf32, #tpu.memory_space<smem>>
      %86 = vector.broadcast %85 : f32 to vector<8x8xf32>
      %87 = arith.mulf %70, %86 : vector<8x8xf32>
      %88 = arith.addf %84, %87 : vector<8x8xf32>
      %cst_62 = arith.constant dense<0.000000e+00> : vector<8x16xf32>
      %89 = tpu.matmul %88, %0, %cst_62 {dimension_numbers = #tpu.dot_dimension_numbers<[1], [0], [0], [1], [0, 0, 1, 1], [], []>} : vector<8x8xf32>, vector<8x16xf32>, vector<8x16xf32> -> vector<8x16xf32>
      %c0_63 = arith.constant 0 : index
      %c0_64 = arith.constant 0 : index
      %90 = vector.load %arg11[%c0_63, %c0_64] : memref<8x144xf32, #tpu.memory_space<vmem>>, vector<8x16xf32>
      tpu.vector_store %arg11[%c0_63, %c0_64], %89 {strides = array<i32>} : memref<8x144xf32, #tpu.memory_space<vmem>>, vector<8x16xf32>,
      %c0_65 = arith.constant 0 : index
      %c1_66 = arith.constant 1 : index
      %91 = memref.load %arg6[%c0_65, %c1_66] : memref<4x4xf32, #tpu.memory_space<smem>>
      %92 = vector.broadcast %91 : f32 to vector<8x8xf32>
      %93 = arith.mulf %64, %92 : vector<8x8xf32>
      %c1_67 = arith.constant 1 : index
      %94 = memref.load %arg7[%c1_67] : memref<4xf32, #tpu.memory_space<smem>>
      %95 = vector.broadcast %94 : f32 to vector<8x8xf32>
      %96 = arith.addf %93, %95 : vector<8x8xf32>
      %c1_68 = arith.constant 1 : index
      %c1_69 = arith.constant 1 : index
      %97 = memref.load %arg6[%c1_68, %c1_69] : memref<4x4xf32, #tpu.memory_space<smem>>
      %98 = vector.broadcast %97 : f32 to vector<8x8xf32>
      %99 = arith.mulf %66, %98 : vector<8x8xf32>
      %100 = arith.addf %96, %99 : vector<8x8xf32>
      %c2_70 = arith.constant 2 : index
      %c1_71 = arith.constant 1 : index
      %101 = memref.load %arg6[%c2_70, %c1_71] : memref<4x4xf32, #tpu.memory_space<smem>>
      %102 = vector.broadcast %101 : f32 to vector<8x8xf32>
      %103 = arith.mulf %68, %102 : vector<8x8xf32>
      %104 = arith.addf %100, %103 : vector<8x8xf32>
      %c3_72 = arith.constant 3 : index
      %c1_73 = arith.constant 1 : index
      %105 = memref.load %arg6[%c3_72, %c1_73] : memref<4x4xf32, #tpu.memory_space<smem>>
      %106 = vector.broadcast %105 : f32 to vector<8x8xf32>
      %107 = arith.mulf %70, %106 : vector<8x8xf32>
      %108 = arith.addf %104, %107 : vector<8x8xf32>
      %cst_74 = arith.constant dense<0.000000e+00> : vector<8x16xf32>
      %109 = tpu.matmul %108, %0, %cst_74 {dimension_numbers = #tpu.dot_dimension_numbers<[1], [0], [0], [1], [0, 0, 1, 1], [], []>} : vector<8x8xf32>, vector<8x16xf32>, vector<8x16xf32> -> vector<8x16xf32>
      %c0_75 = arith.constant 0 : index
      %c16 = arith.constant 16 : index
      %110 = vector.load %arg11[%c0_75, %c16] : memref<8x144xf32, #tpu.memory_space<vmem>>, vector<8x16xf32>
      tpu.vector_store %arg11[%c0_75, %c16], %109 {strides = array<i32>} : memref<8x144xf32, #tpu.memory_space<vmem>>, vector<8x16xf32>,
      %c0_76 = arith.constant 0 : index
      %c2_77 = arith.constant 2 : index
      %111 = memref.load %arg6[%c0_76, %c2_77] : memref<4x4xf32, #tpu.memory_space<smem>>
      %112 = vector.broadcast %111 : f32 to vector<8x8xf32>
      %113 = arith.mulf %64, %112 : vector<8x8xf32>
      %c2_78 = arith.constant 2 : index
      %114 = memref.load %arg7[%c2_78] : memref<4xf32, #tpu.memory_space<smem>>
      %115 = vector.broadcast %114 : f32 to vector<8x8xf32>
      %116 = arith.addf %113, %115 : vector<8x8xf32>
      %c1_79 = arith.constant 1 : index
      %c2_80 = arith.constant 2 : index
      %117 = memref.load %arg6[%c1_79, %c2_80] : memref<4x4xf32, #tpu.memory_space<smem>>
      %118 = vector.broadcast %117 : f32 to vector<8x8xf32>
      %119 = arith.mulf %66, %118 : vector<8x8xf32>
      %120 = arith.addf %116, %119 : vector<8x8xf32>
      %c2_81 = arith.constant 2 : index
      %c2_82 = arith.constant 2 : index
      %121 = memref.load %arg6[%c2_81, %c2_82] : memref<4x4xf32, #tpu.memory_space<smem>>
      %122 = vector.broadcast %121 : f32 to vector<8x8xf32>
      %123 = arith.mulf %68, %122 : vector<8x8xf32>
      %124 = arith.addf %120, %123 : vector<8x8xf32>
      %c3_83 = arith.constant 3 : index
      %c2_84 = arith.constant 2 : index
      %125 = memref.load %arg6[%c3_83, %c2_84] : memref<4x4xf32, #tpu.memory_space<smem>>
      %126 = vector.broadcast %125 : f32 to vector<8x8xf32>
      %127 = arith.mulf %70, %126 : vector<8x8xf32>
      %128 = arith.addf %124, %127 : vector<8x8xf32>
      %cst_85 = arith.constant dense<0.000000e+00> : vector<8x16xf32>
      %129 = tpu.matmul %128, %0, %cst_85 {dimension_numbers = #tpu.dot_dimension_numbers<[1], [0], [0], [1], [0, 0, 1, 1], [], []>} : vector<8x8xf32>, vector<8x16xf32>, vector<8x16xf32> -> vector<8x16xf32>
      %c0_86 = arith.constant 0 : index
      %c32 = arith.constant 32 : index
      %130 = vector.load %arg11[%c0_86, %c32] : memref<8x144xf32, #tpu.memory_space<vmem>>, vector<8x16xf32>
      tpu.vector_store %arg11[%c0_86, %c32], %129 {strides = array<i32>} : memref<8x144xf32, #tpu.memory_space<vmem>>, vector<8x16xf32>,
      %c0_87 = arith.constant 0 : index
      %c3_88 = arith.constant 3 : index
      %131 = memref.load %arg6[%c0_87, %c3_88] : memref<4x4xf32, #tpu.memory_space<smem>>
      %132 = vector.broadcast %131 : f32 to vector<8x8xf32>
      %133 = arith.mulf %64, %132 : vector<8x8xf32>
      %c3_89 = arith.constant 3 : index
      %134 = memref.load %arg7[%c3_89] : memref<4xf32, #tpu.memory_space<smem>>
      %135 = vector.broadcast %134 : f32 to vector<8x8xf32>
      %136 = arith.addf %133, %135 : vector<8x8xf32>
      %c1_90 = arith.constant 1 : index
      %c3_91 = arith.constant 3 : index
      %137 = memref.load %arg6[%c1_90, %c3_91] : memref<4x4xf32, #tpu.memory_space<smem>>
      %138 = vector.broadcast %137 : f32 to vector<8x8xf32>
      %139 = arith.mulf %66, %138 : vector<8x8xf32>
      %140 = arith.addf %136, %139 : vector<8x8xf32>
      %c2_92 = arith.constant 2 : index
      %c3_93 = arith.constant 3 : index
      %141 = memref.load %arg6[%c2_92, %c3_93] : memref<4x4xf32, #tpu.memory_space<smem>>
      %142 = vector.broadcast %141 : f32 to vector<8x8xf32>
      %143 = arith.mulf %68, %142 : vector<8x8xf32>
      %144 = arith.addf %140, %143 : vector<8x8xf32>
      %c3_94 = arith.constant 3 : index
      %c3_95 = arith.constant 3 : index
      %145 = memref.load %arg6[%c3_94, %c3_95] : memref<4x4xf32, #tpu.memory_space<smem>>
      %146 = vector.broadcast %145 : f32 to vector<8x8xf32>
      %147 = arith.mulf %70, %146 : vector<8x8xf32>
      %148 = arith.addf %144, %147 : vector<8x8xf32>
      %cst_96 = arith.constant dense<0.000000e+00> : vector<8x16xf32>
      %149 = tpu.matmul %148, %0, %cst_96 {dimension_numbers = #tpu.dot_dimension_numbers<[1], [0], [0], [1], [0, 0, 1, 1], [], []>} : vector<8x8xf32>, vector<8x16xf32>, vector<8x16xf32> -> vector<8x16xf32>
      %c0_97 = arith.constant 0 : index
      %c48 = arith.constant 48 : index
      %150 = vector.load %arg11[%c0_97, %c48] : memref<8x144xf32, #tpu.memory_space<vmem>>, vector<8x16xf32>
      tpu.vector_store %arg11[%c0_97, %c48], %149 {strides = array<i32>} : memref<8x144xf32, #tpu.memory_space<vmem>>, vector<8x16xf32>,
      %c0_98 = arith.constant 0 : index
      %151 = memref.load %arg8[%c0_98] : memref<4xf32, #tpu.memory_space<smem>>
      %152 = vector.broadcast %151 : f32 to vector<8x8xf32>
      %153 = arith.mulf %64, %152 : vector<8x8xf32>
      %c0_99 = arith.constant 0 : index
      %154 = memref.load %arg9[%c0_99] : memref<1xf32, #tpu.memory_space<smem>>
      %155 = vector.broadcast %154 : f32 to vector<8x8xf32>
      %156 = arith.addf %153, %155 : vector<8x8xf32>
      %c1_100 = arith.constant 1 : index
      %157 = memref.load %arg8[%c1_100] : memref<4xf32, #tpu.memory_space<smem>>
      %158 = vector.broadcast %157 : f32 to vector<8x8xf32>
      %159 = arith.mulf %66, %158 : vector<8x8xf32>
      %160 = arith.addf %156, %159 : vector<8x8xf32>
      %c2_101 = arith.constant 2 : index
      %161 = memref.load %arg8[%c2_101] : memref<4xf32, #tpu.memory_space<smem>>
      %162 = vector.broadcast %161 : f32 to vector<8x8xf32>
      %163 = arith.mulf %68, %162 : vector<8x8xf32>
      %164 = arith.addf %160, %163 : vector<8x8xf32>
      %c3_102 = arith.constant 3 : index
      %165 = memref.load %arg8[%c3_102] : memref<4xf32, #tpu.memory_space<smem>>
      %166 = vector.broadcast %165 : f32 to vector<8x8xf32>
      %167 = arith.mulf %70, %166 : vector<8x8xf32>
      %168 = arith.addf %164, %167 : vector<8x8xf32>
      %cst_103 = arith.constant dense<0.000000e+00> : vector<8x16xf32>
      %169 = tpu.matmul %168, %0, %cst_103 {dimension_numbers = #tpu.dot_dimension_numbers<[1], [0], [0], [1], [0, 0, 1, 1], [], []>} : vector<8x8xf32>, vector<8x16xf32>, vector<8x16xf32> -> vector<8x16xf32>
      %c0_104 = arith.constant 0 : index
      %c64 = arith.constant 64 : index
      %170 = vector.load %arg11[%c0_104, %c64] : memref<8x144xf32, #tpu.memory_space<vmem>>, vector<8x16xf32>
      tpu.vector_store %arg11[%c0_104, %c64], %169 {strides = array<i32>} : memref<8x144xf32, #tpu.memory_space<vmem>>, vector<8x16xf32>,
      %cst_105 = arith.constant dense<0.000000e+00> : vector<8x16xf32>
      %171 = tpu.matmul %64, %0, %cst_105 {dimension_numbers = #tpu.dot_dimension_numbers<[1], [0], [0], [1], [0, 0, 1, 1], [], []>} : vector<8x8xf32>, vector<8x16xf32>, vector<8x16xf32> -> vector<8x16xf32>
      %c0_106 = arith.constant 0 : index
      %c80 = arith.constant 80 : index
      %172 = vector.load %arg11[%c0_106, %c80] : memref<8x144xf32, #tpu.memory_space<vmem>>, vector<8x16xf32>
      tpu.vector_store %arg11[%c0_106, %c80], %171 {strides = array<i32>} : memref<8x144xf32, #tpu.memory_space<vmem>>, vector<8x16xf32>,
      %cst_107 = arith.constant dense<0.000000e+00> : vector<8x16xf32>
      %173 = tpu.matmul %66, %0, %cst_107 {dimension_numbers = #tpu.dot_dimension_numbers<[1], [0], [0], [1], [0, 0, 1, 1], [], []>} : vector<8x8xf32>, vector<8x16xf32>, vector<8x16xf32> -> vector<8x16xf32>
      %c0_108 = arith.constant 0 : index
      %c96 = arith.constant 96 : index
      %174 = vector.load %arg11[%c0_108, %c96] : memref<8x144xf32, #tpu.memory_space<vmem>>, vector<8x16xf32>
      tpu.vector_store %arg11[%c0_108, %c96], %173 {strides = array<i32>} : memref<8x144xf32, #tpu.memory_space<vmem>>, vector<8x16xf32>,
      %cst_109 = arith.constant dense<0.000000e+00> : vector<8x16xf32>
      %175 = tpu.matmul %68, %0, %cst_109 {dimension_numbers = #tpu.dot_dimension_numbers<[1], [0], [0], [1], [0, 0, 1, 1], [], []>} : vector<8x8xf32>, vector<8x16xf32>, vector<8x16xf32> -> vector<8x16xf32>
      %c0_110 = arith.constant 0 : index
      %c112 = arith.constant 112 : index
      %176 = vector.load %arg11[%c0_110, %c112] : memref<8x144xf32, #tpu.memory_space<vmem>>, vector<8x16xf32>
      tpu.vector_store %arg11[%c0_110, %c112], %175 {strides = array<i32>} : memref<8x144xf32, #tpu.memory_space<vmem>>, vector<8x16xf32>,
      %cst_111 = arith.constant dense<0.000000e+00> : vector<8x16xf32>
      %177 = tpu.matmul %70, %0, %cst_111 {dimension_numbers = #tpu.dot_dimension_numbers<[1], [0], [0], [1], [0, 0, 1, 1], [], []>} : vector<8x8xf32>, vector<8x16xf32>, vector<8x16xf32> -> vector<8x16xf32>
      %c0_112 = arith.constant 0 : index
      %c128 = arith.constant 128 : index
      %178 = vector.load %arg11[%c0_112, %c128] : memref<8x144xf32, #tpu.memory_space<vmem>>, vector<8x16xf32>
      tpu.vector_store %arg11[%c0_112, %c128], %177 {strides = array<i32>} : memref<8x144xf32, #tpu.memory_space<vmem>>, vector<8x16xf32>,
    } else {
    }
    %c0_2 = arith.constant 0 : index
    %c0_3 = arith.constant 0 : index
    %4 = vector.load %arg4[%c0_2, %c0_3] : memref<16x8xf32, #tpu.memory_space<vmem>>, vector<16x8xf32>
    %c0_4 = arith.constant 0 : index
    %c0_5 = arith.constant 0 : index
    %5 = vector.load %arg11[%c0_4, %c0_5] : memref<8x144xf32, #tpu.memory_space<vmem>>, vector<8x144xf32>
    %cst = arith.constant dense<0.000000e+00> : vector<16x144xf32>
    %6 = tpu.matmul %4, %5, %cst {dimension_numbers = #tpu.dot_dimension_numbers<[1], [0], [0], [1], [0, 0, 1, 1], [], []>} : vector<16x8xf32>, vector<8x144xf32>, vector<16x144xf32> -> vector<16x144xf32>
    %c0_6 = arith.constant 0 : index
    %c0_7 = arith.constant 0 : index
    %c0_8 = arith.constant 0 : index
    %c0_9 = arith.constant 0 : index
    %7 = vector.load %arg2[%c0_6, %c0_7, %c0_8, %c0_9] : memref<1x4x16x16xf32, #tpu.memory_space<vmem>>, vector<1x1x16x16xf32>
    %8 = vector.shape_cast %7 : vector<1x1x16x16xf32> to vector<16x16xf32>
    %c0_10 = arith.constant 0 : index
    %c1 = arith.constant 1 : index
    %c0_11 = arith.constant 0 : index
    %c0_12 = arith.constant 0 : index
    %9 = vector.load %arg2[%c0_10, %c1, %c0_11, %c0_12] : memref<1x4x16x16xf32, #tpu.memory_space<vmem>>, vector<1x1x16x16xf32>
    %10 = vector.shape_cast %9 : vector<1x1x16x16xf32> to vector<16x16xf32>
    %c0_13 = arith.constant 0 : index
    %c2 = arith.constant 2 : index
    %c0_14 = arith.constant 0 : index
    %c0_15 = arith.constant 0 : index
    %11 = vector.load %arg2[%c0_13, %c2, %c0_14, %c0_15] : memref<1x4x16x16xf32, #tpu.memory_space<vmem>>, vector<1x1x16x16xf32>
    %12 = vector.shape_cast %11 : vector<1x1x16x16xf32> to vector<16x16xf32>
    %c0_16 = arith.constant 0 : index
    %c3 = arith.constant 3 : index
    %c0_17 = arith.constant 0 : index
    %c0_18 = arith.constant 0 : index
    %13 = vector.load %arg2[%c0_16, %c3, %c0_17, %c0_18] : memref<1x4x16x16xf32, #tpu.memory_space<vmem>>, vector<1x1x16x16xf32>
    %14 = vector.shape_cast %13 : vector<1x1x16x16xf32> to vector<16x16xf32>
    %15 = vector.extract_strided_slice %6 {offsets = [0, 64], sizes = [16, 16], strides = [1, 1]} : vector<16x144xf32> to vector<16x16xf32>
    %16 = vector.extract_strided_slice %6 {offsets = [0, 0], sizes = [16, 16], strides = [1, 1]} : vector<16x144xf32> to vector<16x16xf32>
    %17 = arith.mulf %8, %16 : vector<16x16xf32>
    %18 = arith.addf %15, %17 : vector<16x16xf32>
    %19 = vector.extract_strided_slice %6 {offsets = [0, 16], sizes = [16, 16], strides = [1, 1]} : vector<16x144xf32> to vector<16x16xf32>
    %20 = arith.mulf %10, %19 : vector<16x16xf32>
    %21 = arith.addf %18, %20 : vector<16x16xf32>
    %22 = vector.extract_strided_slice %6 {offsets = [0, 32], sizes = [16, 16], strides = [1, 1]} : vector<16x144xf32> to vector<16x16xf32>
    %23 = arith.mulf %12, %22 : vector<16x16xf32>
    %24 = arith.addf %21, %23 : vector<16x16xf32>
    %25 = vector.extract_strided_slice %6 {offsets = [0, 48], sizes = [16, 16], strides = [1, 1]} : vector<16x144xf32> to vector<16x16xf32>
    %26 = arith.mulf %14, %25 : vector<16x16xf32>
    %27 = arith.addf %24, %26 : vector<16x16xf32>
    %28 = arith.negf %27 : vector<16x16xf32>
    %29 = math.exp %28 : vector<16x16xf32>
    %cst_19 = arith.constant 1.000000e+00 : f32
    %30 = vector.broadcast %cst_19 : f32 to vector<16x16xf32>
    %31 = arith.addf %30, %29 : vector<16x16xf32>
    %32 = arith.divf %30, %31 : vector<16x16xf32>
    %cst_20 = arith.constant 1.000000e+00 : f32
    %33 = vector.broadcast %cst_20 : f32 to vector<16x16xf32>
    %34 = arith.subf %33, %32 : vector<16x16xf32>
    %35 = vector.extract_strided_slice %6 {offsets = [0, 80], sizes = [16, 16], strides = [1, 1]} : vector<16x144xf32> to vector<16x16xf32>
    %36 = arith.mulf %34, %8 : vector<16x16xf32>
    %37 = arith.mulf %32, %35 : vector<16x16xf32>
    %38 = arith.addf %36, %37 : vector<16x16xf32>
    %c0_21 = arith.constant 0 : index
    %c0_22 = arith.constant 0 : index
    %c0_23 = arith.constant 0 : index
    %c0_24 = arith.constant 0 : index
    %39 = vector.load %arg10[%c0_21, %c0_22, %c0_23, %c0_24] : memref<1x4x16x16xf32, #tpu.memory_space<vmem>>, vector<1x1x16x16xf32>
    %40 = vector.shape_cast %39 : vector<1x1x16x16xf32> to vector<16x16xf32>
    %41 = vector.shape_cast %38 : vector<16x16xf32> to vector<1x1x16x16xf32>
    tpu.vector_store %arg10[%c0_21, %c0_22, %c0_23, %c0_24], %41 {strides = array<i32>} : memref<1x4x16x16xf32, #tpu.memory_space<vmem>>, vector<1x1x16x16xf32>,
    %42 = vector.extract_strided_slice %6 {offsets = [0, 96], sizes = [16, 16], strides = [1, 1]} : vector<16x144xf32> to vector<16x16xf32>
    %43 = arith.mulf %34, %10 : vector<16x16xf32>
    %44 = arith.mulf %32, %42 : vector<16x16xf32>
    %45 = arith.addf %43, %44 : vector<16x16xf32>
    %c0_25 = arith.constant 0 : index
    %c1_26 = arith.constant 1 : index
    %c0_27 = arith.constant 0 : index
    %c0_28 = arith.constant 0 : index
    %46 = vector.load %arg10[%c0_25, %c1_26, %c0_27, %c0_28] : memref<1x4x16x16xf32, #tpu.memory_space<vmem>>, vector<1x1x16x16xf32>
    %47 = vector.shape_cast %46 : vector<1x1x16x16xf32> to vector<16x16xf32>
    %48 = vector.shape_cast %45 : vector<16x16xf32> to vector<1x1x16x16xf32>
    tpu.vector_store %arg10[%c0_25, %c1_26, %c0_27, %c0_28], %48 {strides = array<i32>} : memref<1x4x16x16xf32, #tpu.memory_space<vmem>>, vector<1x1x16x16xf32>,
    %49 = vector.extract_strided_slice %6 {offsets = [0, 112], sizes = [16, 16], strides = [1, 1]} : vector<16x144xf32> to vector<16x16xf32>
    %50 = arith.mulf %34, %12 : vector<16x16xf32>
    %51 = arith.mulf %32, %49 : vector<16x16xf32>
    %52 = arith.addf %50, %51 : vector<16x16xf32>
    %c0_29 = arith.constant 0 : index
    %c2_30 = arith.constant 2 : index
    %c0_31 = arith.constant 0 : index
    %c0_32 = arith.constant 0 : index
    %53 = vector.load %arg10[%c0_29, %c2_30, %c0_31, %c0_32] : memref<1x4x16x16xf32, #tpu.memory_space<vmem>>, vector<1x1x16x16xf32>
    %54 = vector.shape_cast %53 : vector<1x1x16x16xf32> to vector<16x16xf32>
    %55 = vector.shape_cast %52 : vector<16x16xf32> to vector<1x1x16x16xf32>
    tpu.vector_store %arg10[%c0_29, %c2_30, %c0_31, %c0_32], %55 {strides = array<i32>} : memref<1x4x16x16xf32, #tpu.memory_space<vmem>>, vector<1x1x16x16xf32>,
    %56 = vector.extract_strided_slice %6 {offsets = [0, 128], sizes = [16, 16], strides = [1, 1]} : vector<16x144xf32> to vector<16x16xf32>
    %57 = arith.mulf %34, %14 : vector<16x16xf32>
    %58 = arith.mulf %32, %56 : vector<16x16xf32>
    %59 = arith.addf %57, %58 : vector<16x16xf32>
    %c0_33 = arith.constant 0 : index
    %c3_34 = arith.constant 3 : index
    %c0_35 = arith.constant 0 : index
    %c0_36 = arith.constant 0 : index
    %60 = vector.load %arg10[%c0_33, %c3_34, %c0_35, %c0_36] : memref<1x4x16x16xf32, #tpu.memory_space<vmem>>, vector<1x1x16x16xf32>
    %61 = vector.shape_cast %60 : vector<1x1x16x16xf32> to vector<16x16xf32>
    %62 = vector.shape_cast %59 : vector<16x16xf32> to vector<1x1x16x16xf32>
    tpu.vector_store %arg10[%c0_33, %c3_34, %c0_35, %c0_36], %62 {strides = array<i32>} : memref<1x4x16x16xf32, #tpu.memory_space<vmem>>, vector<1x1x16x16xf32>,
    return
  }
  func.func @transform_0(%arg0: i32, %arg1: i32) -> (i32, i32, i32, i32) {
    %c0_i32 = arith.constant 0 : i32
    %c0_i32_0 = arith.constant 0 : i32
    %c0_i32_1 = arith.constant 0 : i32
    return %arg0, %c0_i32, %arg1, %c0_i32_0 : i32, i32, i32, i32
  }
  func.func @transform_1(%arg0: i32, %arg1: i32) -> (i32, i32, i32, i32) {
    %c0_i32 = arith.constant 0 : i32
    %c0_i32_0 = arith.constant 0 : i32
    %c0_i32_1 = arith.constant 0 : i32
    %c0_i32_2 = arith.constant 0 : i32
    return %arg0, %c0_i32, %c0_i32_0, %c0_i32_1 : i32, i32, i32, i32
  }
  func.func @transform_2(%arg0: i32, %arg1: i32) -> (i32, i32) {
    %c0_i32 = arith.constant 0 : i32
    %c0_i32_0 = arith.constant 0 : i32
    return %arg1, %c0_i32 : i32, i32
  }
  func.func @transform_3(%arg0: i32, %arg1: i32) -> (i32, i32) {
    %c0_i32 = arith.constant 0 : i32
    %c0_i32_0 = arith.constant 0 : i32
    %c0_i32_1 = arith.constant 0 : i32
    return %c0_i32, %c0_i32_0 : i32, i32
  }
  func.func @transform_4(%arg0: i32, %arg1: i32) -> (i32, i32) {
    %c0_i32 = arith.constant 0 : i32
    %c0_i32_0 = arith.constant 0 : i32
    %c0_i32_1 = arith.constant 0 : i32
    return %c0_i32, %c0_i32_0 : i32, i32
  }
  func.func @transform_5(%arg0: i32, %arg1: i32) -> i32 {
    %c0_i32 = arith.constant 0 : i32
    %c0_i32_0 = arith.constant 0 : i32
    return %c0_i32 : i32
  }
  func.func @transform_6(%arg0: i32, %arg1: i32) -> i32 {
    %c0_i32 = arith.constant 0 : i32
    %c0_i32_0 = arith.constant 0 : i32
    return %c0_i32 : i32
  }
  func.func @transform_7(%arg0: i32, %arg1: i32) -> i32 {
    %c0_i32 = arith.constant 0 : i32
    %c0_i32_0 = arith.constant 0 : i32
    return %c0_i32 : i32
  }
  func.func @transform_8(%arg0: i32, %arg1: i32) -> (i32, i32, i32, i32) {
    %c0_i32 = arith.constant 0 : i32
    %c0_i32_0 = arith.constant 0 : i32
    %c0_i32_1 = arith.constant 0 : i32
    return %arg0, %c0_i32, %arg1, %c0_i32_0 : i32, i32, i32, i32
  }
}

</mosaic_0001>

<llo_original>
// kernel: pagfm_forward.1
$region0: #{pagfm_forward.1}
  #allocation0 [shape = 'u32[]', space=smem, size = 0x4, offset = 0x4, fixed_abs, tag = 'smem constant byte address 0x4 - core index']
  #allocation1 [shape = 'u32[144,128]{1,0:T(1,128)}', space=vmem, size = 0x12000, scoped, tag = 'internal scratch']
  #allocation2 [shape = 'f32[8,144]{1,0:T(8,128)}', space=vmem, size = 0x2000, scoped, tag = 'scratch operand']
  #allocation3 [shape = 'f32[1]{0:T(128)S(6)}', space=smem, size = 0x200, scoped, tag = 'scoped memory for pagfm_forward.1']
  %s0 = inlined_call_operand.vmem [shape: f32[2,4,16,16], index: 0, kind: input, shape index: {}]
  %s1 = inlined_call_operand.vmem [shape: f32[2,4,8,8], index: 1, kind: input, shape index: {}]
  %s2 = inlined_call_operand.vmem [shape: f32[16,8], index: 2, kind: input, shape index: {}]
  %s3 = inlined_call_operand.vmem [shape: f32[8,16], index: 3, kind: input, shape index: {}]
  %s4 = inlined_call_operand.vmem [shape: f32[4,4], index: 4, kind: input, shape index: {}]
  %s5 = inlined_call_operand.vmem [shape: f32[4], index: 5, kind: input, shape index: {}]
  %s6 = inlined_call_operand.vmem [shape: f32[4], index: 6, kind: input, shape index: {}]
  %s7 = inlined_call_operand.<no memory space> [shape: f32[1], index: 7, kind: input, shape index: {}]
  %s8 = inlined_call_operand.hbm [shape: f32[2,4,16,16], index: 8, kind: output, shape index: {}]
  %s9 = sld [smem:[#allocation0]]
  $region81: #{pagfm_forward.1} parent=0
    _
  %s11 = ssub.s32 1, %s9
  %s12 = scalar_select 0, %s11, %s9
  %13 = sst [smem:[#allocation3]] %s7
  $region1: #{pagfm_forward.1} parent=0
    #allocation4 [shape = 'u8[2048]{0}', space=smem, size = 0x800, scoped, tag = 'input window, operand 4, single buffered']
    #allocation5 [shape = 's32[2]{0}', space=sflag, size = 0x8, scoped, tag = 'scoped memory for pagfm_forward.1']
    #allocation6 [shape = 's32[2]{0}', space=sflag, size = 0x8, scoped, tag = 'scoped memory for pagfm_forward.1']
    #allocation7 [shape = 'u8[512]{0}', space=smem, size = 0x200, scoped, tag = 'input window, operand 5, single buffered']
    #allocation8 [shape = 's32[1]{0}', space=sflag, size = 0x4, scoped, tag = 'scoped memory for pagfm_forward.1']
    #allocation9 [shape = 'u8[512]{0}', space=smem, size = 0x200, scoped, tag = 'input window, operand 6, single buffered']
    #allocation10 [shape = 'u8[65536]{0}', space=vmem, size = 0x10000, scoped, tag = 'output window, operand 0']
    %14 = vsyncpa [#allocation6], 0
    %15 = vsyncpa [#allocation8], 0
    %16 = vsyncpa [#allocation5], 0
    %s17 = scalar_lea.sflag [#allocation5], 1
    %18 = vsyncpa %s17, 0
    loop: start=0, step=1, limit=4
    $region2: #{pagfm_forward.1} parent=1 // loop_pre_header
      _
    $region3: #{pagfm_forward.1} parent=1 // loop_header
      %s20 = sphi 0, %s24
      %p21 = scmp.ge.s32.totalorder %s20, 4
      %s27 = sphi 0, %s39
      %s28 = sphi 0, %s35
      %s29 = sphi 0, %s27
      %s30 = sphi 0, %s28
      %s31 = sphi 0, %s29
      %s32 = sphi 0, %s30
      %s44 = sphi 0, %s46
      %s47 = sphi 0, %s44
      %s48 = sphi 0, %s47
      %s64 = sphi 0, %s48
      %s70 = sphi 0, %s72
      %s73 = sphi 0, %s70
      %s74 = sphi 0, %s73
      %s90 = sphi 0, %s74
      %s96 = sphi 0, %s98
      %s99 = sphi 0, %s96
      %s100 = sphi 0, %s99
      %s116 = sphi 0, %s100
      %s120 = sphi 0, %s120
      %s122 = sphi 0, %s120
      %s123 = sphi 0, %s122
      %s137 = sphi 0, %s123
      %s141 = sphi 0, %s141
      %s143 = sphi 0, %s141
      %s144 = sphi 0, %s143
      %s158 = sphi 0, %s144
      %s162 = sphi 0, %s162
      %s164 = sphi 0, %s162
      %s165 = sphi 0, %s164
      %s179 = sphi 0, %s165
      %s183 = sphi 0, %s183
      %s185 = sphi 0, %s183
      %s186 = sphi 0, %s185
      %s200 = sphi 0, %s186
      %s204 = sphi 0, %s204
      %s206 = sphi 0, %s204
      %s207 = sphi 0, %s206
      %s221 = sphi 0, %s207
      %s229 = sphi 0, %s231
      %s232 = sphi 0, %s229
      %s233 = sphi 0, %s232
      %s249 = sphi 0, %s233
    $region4: #{pagfm_forward.1} parent=1 // loop_header_branch
      %23 = sbr.rel (%p21) target = $region8
    $region5: #{pagfm_forward.1} parent=1 // loop_body
      %s25 = ssub.s32 %s20, 1
      %s26 = ssub.s32 %s20, 2
      %s33 = sadd.s32 1, %s28
      %p34 = scmp.ge.s32.totalorder %s33, 1
      %s35 = scalar_select %p34, 0, %s33
      %s36 = sadd.s32 1, %s27
      %s37 = scalar_select %p34, %s36, %s27
      %p38 = scmp.ge.s32.totalorder %s37, 2
      %s39 = scalar_select %p38, 0, %s37
      %s40 = ssub.s32 %s27, %s39
      %s41 = ssub.s32 %s28, %s35
      %s42 = sor.u32 %s40, %s41
      %p43 = scmp.eq.s32.totalorder %s42, 0
      %s45 = sadd.s32 %s44, 1
      %s46 = scalar_select %p43, %s44, %s45
      %p49 = pneg %p43
      %p50 = scmp.eq.s32.totalorder %s20, 1
      %p51 = por %p49, %p50
      %p52 = scmp.ne.s32.totalorder %s44, %s47
      %p53 = scmp.eq.s32.totalorder %s20, 0
      %p54 = por %p52, %p53
      %p55 = scmp.ne.s32.totalorder %s44, %s47
      %p56 = scmp.eq.s32.totalorder %s25, 1
      %p57 = por %p55, %p56
      %p58 = scmp.ne.s32.totalorder %s47, %s48
      %p59 = scmp.eq.s32.totalorder %s25, 0
      %p60 = por %p58, %p59
      %p61 = scmp.ne.s32.totalorder %s47, %s48
      %p62 = scmp.eq.s32.totalorder %s26, 1
      %p63 = por %p61, %p62
      %p65 = scmp.ne.s32.totalorder %s48, %s64
      %p66 = scmp.eq.s32.totalorder %s26, 0
      %p67 = por %p65, %p66
      %s68 = ssub.s32 %s27, %s39
      %p69 = scmp.eq.s32.totalorder %s68, 0
      %s71 = sadd.s32 %s70, 1
      %s72 = scalar_select %p69, %s70, %s71
      %p75 = pneg %p69
      %p76 = scmp.eq.s32.totalorder %s20, 1
      %p77 = por %p75, %p76
      %p78 = scmp.ne.s32.totalorder %s70, %s73
      %p79 = scmp.eq.s32.totalorder %s20, 0
      %p80 = por %p78, %p79
      %p81 = scmp.ne.s32.totalorder %s70, %s73
      %p82 = scmp.eq.s32.totalorder %s25, 1
      %p83 = por %p81, %p82
      %p84 = scmp.ne.s32.totalorder %s73, %s74
      %p85 = scmp.eq.s32.totalorder %s25, 0
      %p86 = por %p84, %p85
      %p87 = scmp.ne.s32.totalorder %s73, %s74
      %p88 = scmp.eq.s32.totalorder %s26, 1
      %p89 = por %p87, %p88
      %p91 = scmp.ne.s32.totalorder %s74, %s90
      %p92 = scmp.eq.s32.totalorder %s26, 0
      %p93 = por %p91, %p92
      %s94 = ssub.s32 %s28, %s35
      %p95 = scmp.eq.s32.totalorder %s94, 0
      %s97 = sadd.s32 %s96, 1
      %s98 = scalar_select %p95, %s96, %s97
      %p101 = pneg %p95
      %p102 = scmp.eq.s32.totalorder %s20, 1
      %p103 = por %p101, %p102
      %p104 = scmp.ne.s32.totalorder %s96, %s99
      %p105 = scmp.eq.s32.totalorder %s20, 0
      %p106 = por %p104, %p105
      %p107 = scmp.ne.s32.totalorder %s96, %s99
      %p108 = scmp.eq.s32.totalorder %s25, 1
      %p109 = por %p107, %p108
      %p110 = scmp.ne.s32.totalorder %s99, %s100
      %p111 = scmp.eq.s32.totalorder %s25, 0
      %p112 = por %p110, %p111
      %p113 = scmp.ne.s32.totalorder %s99, %s100
      %p114 = scmp.eq.s32.totalorder %s26, 1
      %p115 = por %p113, %p114
      %p117 = scmp.ne.s32.totalorder %s100, %s116
      %p118 = scmp.eq.s32.totalorder %s26, 0
      %p119 = por %p117, %p118
      %s121 = sadd.s32 %s120, 1
      %p124 = scmp.eq.s32.totalorder %s20, 1
      %p125 = scmp.ne.s32.totalorder %s120, %s122
      %p126 = scmp.eq.s32.totalorder %s20, 0
      %p127 = por %p125, %p126
      %p128 = scmp.ne.s32.totalorder %s120, %s122
      %p129 = scmp.eq.s32.totalorder %s25, 1
      %p130 = por %p128, %p129
      %p131 = scmp.ne.s32.totalorder %s122, %s123
      %p132 = scmp.eq.s32.totalorder %s25, 0
      %p133 = por %p131, %p132
      %p134 = scmp.ne.s32.totalorder %s122, %s123
      %p135 = scmp.eq.s32.totalorder %s26, 1
      %p136 = por %p134, %p135
      %p138 = scmp.ne.s32.totalorder %s123, %s137
      %p139 = scmp.eq.s32.totalorder %s26, 0
      %p140 = por %p138, %p139
      %s142 = sadd.s32 %s141, 1
      %p145 = scmp.eq.s32.totalorder %s20, 1
      %p146 = scmp.ne.s32.totalorder %s141, %s143
      %p147 = scmp.eq.s32.totalorder %s20, 0
      %p148 = por %p146, %p147
      %p149 = scmp.ne.s32.totalorder %s141, %s143
      %p150 = scmp.eq.s32.totalorder %s25, 1
      %p151 = por %p149, %p150
      %p152 = scmp.ne.s32.totalorder %s143, %s144
      %p153 = scmp.eq.s32.totalorder %s25, 0
      %p154 = por %p152, %p153
      %p155 = scmp.ne.s32.totalorder %s143, %s144
      %p156 = scmp.eq.s32.totalorder %s26, 1
      %p157 = por %p155, %p156
      %p159 = scmp.ne.s32.totalorder %s144, %s158
      %p160 = scmp.eq.s32.totalorder %s26, 0
      %p161 = por %p159, %p160
      %s163 = sadd.s32 %s162, 1
      %p166 = scmp.eq.s32.totalorder %s20, 1
      %p167 = scmp.ne.s32.totalorder %s162, %s164
      %p168 = scmp.eq.s32.totalorder %s20, 0
      %p169 = por %p167, %p168
      %p170 = scmp.ne.s32.totalorder %s162, %s164
      %p171 = scmp.eq.s32.totalorder %s25, 1
      %p172 = por %p170, %p171
      %p173 = scmp.ne.s32.totalorder %s164, %s165
      %p174 = scmp.eq.s32.totalorder %s25, 0
      %p175 = por %p173, %p174
      %p176 = scmp.ne.s32.totalorder %s164, %s165
      %p177 = scmp.eq.s32.totalorder %s26, 1
      %p178 = por %p176, %p177
      %p180 = scmp.ne.s32.totalorder %s165, %s179
      %p181 = scmp.eq.s32.totalorder %s26, 0
      %p182 = por %p180, %p181
      %s184 = sadd.s32 %s183, 1
      %p187 = scmp.eq.s32.totalorder %s20, 1
      %p188 = scmp.ne.s32.totalorder %s183, %s185
      %p189 = scmp.eq.s32.totalorder %s20, 0
      %p190 = por %p188, %p189
      %p191 = scmp.ne.s32.totalorder %s183, %s185
      %p192 = scmp.eq.s32.totalorder %s25, 1
      %p193 = por %p191, %p192
      %p194 = scmp.ne.s32.totalorder %s185, %s186
      %p195 = scmp.eq.s32.totalorder %s25, 0
      %p196 = por %p194, %p195
      %p197 = scmp.ne.s32.totalorder %s185, %s186
      %p198 = scmp.eq.s32.totalorder %s26, 1
      %p199 = por %p197, %p198
      %p201 = scmp.ne.s32.totalorder %s186, %s200
      %p202 = scmp.eq.s32.totalorder %s26, 0
      %p203 = por %p201, %p202
      %s205 = sadd.s32 %s204, 1
      %p208 = scmp.eq.s32.totalorder %s20, 1
      %p209 = scmp.ne.s32.totalorder %s204, %s206
      %p210 = scmp.eq.s32.totalorder %s20, 0
      %p211 = por %p209, %p210
      %p212 = scmp.ne.s32.totalorder %s204, %s206
      %p213 = scmp.eq.s32.totalorder %s25, 1
      %p214 = por %p212, %p213
      %p215 = scmp.ne.s32.totalorder %s206, %s207
      %p216 = scmp.eq.s32.totalorder %s25, 0
      %p217 = por %p215, %p216
      %p218 = scmp.ne.s32.totalorder %s206, %s207
      %p219 = scmp.eq.s32.totalorder %s26, 1
      %p220 = por %p218, %p219
      %p222 = scmp.ne.s32.totalorder %s207, %s221
      %p223 = scmp.eq.s32.totalorder %s26, 0
      %p224 = por %p222, %p223
      %s225 = ssub.s32 %s27, %s39
      %s226 = ssub.s32 %s28, %s35
      %s227 = sor.u32 %s225, %s226
      %p228 = scmp.eq.s32.totalorder %s227, 0
      %s230 = sadd.s32 %s229, 1
      %s231 = scalar_select %p228, %s229, %s230
      %p234 = pneg %p228
      %p235 = scmp.eq.s32.totalorder %s20, 1
      %p236 = por %p234, %p235
      %p237 = scmp.ne.s32.totalorder %s229, %s232
      %p238 = scmp.eq.s32.totalorder %s20, 0
      %p239 = por %p237, %p238
      %p240 = scmp.ne.s32.totalorder %s229, %s232
      %p241 = scmp.eq.s32.totalorder %s25, 1
      %p242 = por %p240, %p241
      %p243 = scmp.ne.s32.totalorder %s232, %s233
      %p244 = scmp.eq.s32.totalorder %s25, 0
      %p245 = por %p243, %p244
      %p246 = scmp.ne.s32.totalorder %s232, %s233
      %p247 = scmp.eq.s32.totalorder %s26, 1
      %p248 = por %p246, %p247
      %p250 = scmp.ne.s32.totalorder %s233, %s249
      %p251 = scmp.eq.s32.totalorder %s26, 0
      %p252 = por %p250, %p251
      %p253 = scmp.le.s32.totalorder 1, %s20
      %p254 = scmp.lt.s32.totalorder %s20, 3
      %p255 = pnand %p253, %p254
      %p256 = pneg %p255
      // Predicated region
      $region9: #{pagfm_forward.1} parent=5 // pred_check
        _
      $region10: #{pagfm_forward.1} parent=5 // pred_check_branch
        %258 = sbr.rel (%p255) target = $region12
      $region11: #{pagfm_forward.1} parent=5 // pred_region
        %s259 = ssub.s32 %s20, 1
        // Predicated region
        $region13: #{pagfm_forward.1} parent=11 // pred_check
          %p260 = pneg %p112
        $region14: #{pagfm_forward.1} parent=11 // pred_check_branch
          %262 = sbr.rel (%p260) target = $region16
        $region15: #{pagfm_forward.1} parent=11 // pred_region
          %s263 = smul.u32 2, %s30
          %p264 = scmp.lt.s32.totalorder %s263, 1
          %s265 = scalar_select %p264, %s263, 1
          %s266 = smul.addr %s265, 8
          %s267 = scalar_lea.vmem %s2, %s266
          %s268 = smul.u32 2, %s30
        $region16: #{pagfm_forward.1} parent=11 // pred_fallthru
          _
        // Predicated region
        $region17: #{pagfm_forward.1} parent=11 // pred_check
          %p269 = pneg %p133
        $region18: #{pagfm_forward.1} parent=11 // pred_check_branch
          %271 = sbr.rel (%p269) target = $region20
        $region19: #{pagfm_forward.1} parent=11 // pred_region
          _
        $region20: #{pagfm_forward.1} parent=11 // pred_fallthru
          _
        // Predicated region
        $region21: #{pagfm_forward.1} parent=11 // pred_check
          %p272 = pneg %p154
        $region22: #{pagfm_forward.1} parent=11 // pred_check_branch
          %274 = sbr.rel (%p272) target = $region24
        $region23: #{pagfm_forward.1} parent=11 // pred_region
          %s276 = ssub.s32 64, 64
          %277 = vsyncadd [#allocation6], %s276
          %s279 = sshll.u32 %s4, 4
          %s280 = int_to_ptr.vmem [resolvable:$true] %s279
          %282 = dma.vmem_to_smem %s280, 64, [#allocation4], [#allocation6]
        $region24: #{pagfm_forward.1} parent=11 // pred_fallthru
          _
        // Predicated region
        $region25: #{pagfm_forward.1} parent=11 // pred_check
          %p283 = pneg %p175
        $region26: #{pagfm_forward.1} parent=11 // pred_check_branch
          %285 = sbr.rel (%p283) target = $region28
        $region27: #{pagfm_forward.1} parent=11 // pred_region
          %s287 = ssub.s32 16, 16
          %288 = vsyncadd [#allocation8], %s287
          %s290 = sshll.u32 %s5, 4
          %s291 = int_to_ptr.vmem [resolvable:$true] %s290
          %293 = dma.vmem_to_smem %s291, 16, [#allocation7], [#allocation8]
        $region28: #{pagfm_forward.1} parent=11 // pred_fallthru
          _
        // Predicated region
        $region29: #{pagfm_forward.1} parent=11 // pred_check
          %p294 = pneg %p196
        $region30: #{pagfm_forward.1} parent=11 // pred_check_branch
          %296 = sbr.rel (%p294) target = $region32
        $region31: #{pagfm_forward.1} parent=11 // pred_region
          %s298 = ssub.s32 16, 16
          %299 = vsyncadd [#allocation8], %s298
          %s301 = sshll.u32 %s6, 4
          %s302 = int_to_ptr.vmem [resolvable:$true] %s301
          %304 = dma.vmem_to_smem %s302, 16, [#allocation9], [#allocation8]
        $region32: #{pagfm_forward.1} parent=11 // pred_fallthru
          _
        // Predicated region
        $region33: #{pagfm_forward.1} parent=11 // pred_check
          %p305 = pneg %p217
        $region34: #{pagfm_forward.1} parent=11 // pred_check_branch
          %307 = sbr.rel (%p305) target = $region36
        $region35: #{pagfm_forward.1} parent=11 // pred_region
          _
        $region36: #{pagfm_forward.1} parent=11 // pred_fallthru
          _
      $region12: #{pagfm_forward.1} parent=5 // pred_fallthru
        _
      %p308 = scmp.lt.s32.totalorder %s20, 2
      // Predicated region
      $region37: #{pagfm_forward.1} parent=5 // pred_check
        %p309 = pneg %p308
      $region38: #{pagfm_forward.1} parent=5 // pred_check_branch
        %311 = sbr.rel (%p309) target = $region40
      $region39: #{pagfm_forward.1} parent=5 // pred_region
        // Predicated region
        $region41: #{pagfm_forward.1} parent=39 // pred_check
          %p312 = pneg %p54
        $region42: #{pagfm_forward.1} parent=39 // pred_check_branch
          %314 = sbr.rel (%p312) target = $region44
        $region43: #{pagfm_forward.1} parent=39 // pred_region
          %s315 = smul.u32 2, %s28
          %p316 = scmp.lt.s32.totalorder %s27, 1
          %s317 = scalar_select %p316, %s27, 1
          %p318 = scmp.lt.s32.totalorder %s315, 1
          %s319 = scalar_select %p318, %s315, 1
          %s320 = smul.addr %s317, 8
          %s321 = sadd.s32 %s319, %s320
          %s322 = smul.addr %s321, 8
          %s323 = scalar_lea.vmem %s0, %s322
          %s324 = smul.u32 2, %s28
        $region44: #{pagfm_forward.1} parent=39 // pred_fallthru
          _
        // Predicated region
        $region45: #{pagfm_forward.1} parent=39 // pred_check
          %p325 = pneg %p80
        $region46: #{pagfm_forward.1} parent=39 // pred_check_branch
          %327 = sbr.rel (%p325) target = $region48
        $region47: #{pagfm_forward.1} parent=39 // pred_region
          %p328 = scmp.lt.s32.totalorder %s27, 1
          %s329 = scalar_select %p328, %s27, 1
          %s330 = smul.addr %s329, 4
          %s331 = smul.addr %s330, 8
          %s332 = scalar_lea.vmem %s1, %s331
        $region48: #{pagfm_forward.1} parent=39 // pred_fallthru
          _
      $region40: #{pagfm_forward.1} parent=5 // pred_fallthru
        _
      %p333 = scmp.le.s32.totalorder 1, %s20
      %p334 = scmp.lt.s32.totalorder %s20, 3
      %p335 = pnand %p333, %p334
      %p336 = pneg %p335
      // Predicated region
      $region49: #{pagfm_forward.1} parent=5 // pred_check
        _
      $region50: #{pagfm_forward.1} parent=5 // pred_check_branch
        %338 = sbr.rel (%p335) target = $region52
      $region51: #{pagfm_forward.1} parent=5 // pred_region
        %s339 = ssub.s32 %s20, 1
        // Predicated region
        $region53: #{pagfm_forward.1} parent=51 // pred_check
          %p340 = pneg %p154
        $region54: #{pagfm_forward.1} parent=51 // pred_check_branch
          %342 = sbr.rel (%p340) target = $region56
        $region55: #{pagfm_forward.1} parent=51 // pred_region
          %343 = dma.done [#allocation6], 64
        $region56: #{pagfm_forward.1} parent=51 // pred_fallthru
          _
        // Predicated region
        $region57: #{pagfm_forward.1} parent=51 // pred_check
          %p344 = pneg %p175
        $region58: #{pagfm_forward.1} parent=51 // pred_check_branch
          %346 = sbr.rel (%p344) target = $region60
        $region59: #{pagfm_forward.1} parent=51 // pred_region
          %347 = dma.done [#allocation8], 16
        $region60: #{pagfm_forward.1} parent=51 // pred_fallthru
          _
        // Predicated region
        $region61: #{pagfm_forward.1} parent=51 // pred_check
          %p348 = pneg %p196
        $region62: #{pagfm_forward.1} parent=51 // pred_check_branch
          %350 = sbr.rel (%p348) target = $region64
        $region63: #{pagfm_forward.1} parent=51 // pred_region
          %351 = dma.done [#allocation8], 16
        $region64: #{pagfm_forward.1} parent=51 // pred_fallthru
          _
        %352 = sfence
        %s353 = smul.u32 2, %s30
        %p354 = scmp.lt.s32.totalorder %s29, 1
        %s355 = scalar_select %p354, %s29, 1
        %p356 = scmp.lt.s32.totalorder %s353, 1
        %s357 = scalar_select %p356, %s353, 1
        %s358 = smul.addr %s355, 8
        %s359 = sadd.s32 %s357, %s358
        %s360 = smul.addr %s359, 8
        %s361 = scalar_lea.vmem %s0, %s360
        %p362 = pneg %p60
        %p363 = pneg %p57
        %p364 = scmp.lt.s32.totalorder %s29, 1
        %s365 = scalar_select %p364, %s29, 1
        %s366 = smul.addr %s365, 4
        %s367 = smul.addr %s366, 8
        %s368 = scalar_lea.vmem %s1, %s367
        %p369 = pneg %p86
        %p370 = pneg %p83
        %s371 = smul.u32 2, %s30
        %p372 = scmp.lt.s32.totalorder %s371, 1
        %s373 = scalar_select %p372, %s371, 1
        %s374 = smul.addr %s373, 8
        %s375 = scalar_lea.vmem %s2, %s374
        %p376 = pneg %p112
        %p377 = pneg %p109
        %p378 = pneg %p133
        %p379 = pneg %p130
        %p380 = pneg %p154
        %p381 = pneg %p151
        %p382 = pneg %p175
        %p383 = pneg %p172
        %p384 = pneg %p196
        %p385 = pneg %p193
        %p386 = pneg %p217
        %p387 = pneg %p214
        %p388 = pneg %p245
        %p389 = pneg %p242
        %s390 = sand.u32 %s232, 1
        %s391 = scalar_lea.sflag [#allocation5], %s390
        %s392 = sand.u32 %s232, 1
        %s393 = smul.addr %s392, 64
        %s394 = scalar_lea.vmem [#allocation10], %s393
        %s395 = smul.u32 2, %s30
        %p396 = scmp.lt.s32.totalorder %s29, 1
        %s397 = scalar_select %p396, %s29, 1
        %p398 = scmp.lt.s32.totalorder %s395, 1
        %s399 = scalar_select %p398, %s395, 1
        %s400 = smul.addr %s397, 8
        %s401 = sadd.s32 %s399, %s400
        %s402 = smul.addr %s401, 8
        %s403 = scalar_lea.vmem %s0, %s402
        %s404 = smul.u32 2, %s30
        %p405 = scmp.lt.s32.totalorder %s29, 1
        %s406 = scalar_select %p405, %s29, 1
        %s407 = smul.addr %s406, 4
        %s408 = smul.addr %s407, 8
        %s409 = scalar_lea.vmem %s1, %s408
        %s410 = smul.u32 2, %s30
        %p411 = scmp.lt.s32.totalorder %s410, 1
        %s412 = scalar_select %p411, %s410, 1
        %s413 = smul.addr %s412, 8
        %s414 = scalar_lea.vmem %s2, %s413
        %s415 = smul.u32 2, %s30
        %s416 = smul.u32 2, %s30
        %v417 = vld [vmem:[%s3] sm:$0xff]
        %p418 = scmp.eq.s32.totalorder %s30, 0
        // Predicated region
        $region65: #{pagfm_forward.1} parent=51 // pred_check
          %p419 = pneg %p418
        $region66: #{pagfm_forward.1} parent=51 // pred_check_branch
          %421 = sbr.rel (%p419) target = $region68
        $region67: #{pagfm_forward.1} parent=51 // pred_region
          %v422 = vld [vmem:[%s409] sm:$0xff]
          %s423 = scalar_lea.vmem %s409, 8
          %v424 = vld [vmem:[%s423] sm:$0xff]
          %s425 = scalar_lea.vmem %s409, 16
          %v426 = vld [vmem:[%s425] sm:$0xff]
          %s427 = scalar_lea.vmem %s409, 24
          %v428 = vld [vmem:[%s427] sm:$0xff]
          %s429 = sld [smem:[#allocation4]]
          %v430 = vstv %s429
          %v431 = vmul.f32 %v422, %v430
          %s432 = sld [smem:[#allocation7]]
          %v433 = vstv %s432
          %v434 = vadd.f32 %v431, %v433
          %s435 = sld [smem:[#allocation4 + $0x80]]
          %v436 = vstv %s435
          %v437 = vmul.f32 %v424, %v436
          %v438 = vadd.f32 %v434, %v437
          %s439 = sld [smem:[#allocation4 + $0x100]]
          %v440 = vstv %s439
          %v441 = vmul.f32 %v426, %v440
          %v442 = vadd.f32 %v438, %v441
          %s443 = sld [smem:[#allocation4 + $0x180]]
          %v444 = vstv %s443
          %v445 = vmul.f32 %v428, %v444
          %v446 = vadd.f32 %v442, %v445
          %vm447 = vcmask 64512
          %v449 = vsel %vm447, %v446, 0
          %451 = vmatprep.subr.mxu0 0.0
          %452 = vmatpush1.msra.mxu0 %v417
          %453 = vmatprep.subr.mxu0 0.0
          %454 = vmatpush1.msra.mxu0 0.0
          %455 = vmatprep.subr.mxu0 0.0
          %456 = vmatpush1.msra.mxu0 0.0
          %457 = vmatprep.subr.mxu0 0.0
          %458 = vmatpush1.msra.mxu0 0.0
          %459 = vmatprep.subr.mxu0 0.0
          %460 = vmatpush1.msra.mxu0 0.0
          %461 = vmatprep.subr.mxu0 0.0
          %462 = vmatpush1.msra.mxu0 0.0
          %463 = vmatprep.subr.mxu0 0.0
          %464 = vmatpush1.msra.mxu0 0.0
          %465 = vmatprep.subr.mxu0 0.0
          %466 = vmatpush1.msra.mxu0 0.0
          %467 = vmatprep.subr.mxu0 0.0
          %468 = vmatpush1.msra.mxu0 0.0
          %469 = vmatprep.subr.mxu0 0.0
          %470 = vmatpush1.msra.mxu0 0.0
          %471 = vmatprep.subr.mxu0 0.0
          %472 = vmatpush1.msra.mxu0 0.0
          %473 = vmatprep.subr.mxu0 0.0
          %474 = vmatpush1.msra.mxu0 0.0
          %475 = vmatprep.subr.mxu0 0.0
          %476 = vmatpush1.msra.mxu0 0.0
          %477 = vmatprep.subr.mxu0 0.0
          %478 = vmatpush1.msra.mxu0 0.0
          %479 = vmatprep.subr.mxu0 0.0
          %480 = vmatpush1.msra.mxu0 0.0
          %481 = vmatprep.subr.mxu0 0.0
          %482 = vmatpush1.msra.mxu0 0.0
          %483 = vmatprep.subr.mxu0 0.0
          %484 = vmatpush1.msra.mxu0 0.0
          %485 = vmatprep.subr.mxu0 0.0
          %486 = vmatpush1.msra.mxu0 0.0
          %487 = vmatprep.subr.mxu0 0.0
          %488 = vmatpush1.msra.mxu0 0.0
          %489 = vmatprep.subr.mxu0 0.0
          %490 = vmatpush1.msra.mxu0 0.0
          %491 = vmatprep.subr.mxu0 0.0
          %492 = vmatpush1.msra.mxu0 0.0
          %493 = vmatprep.subr.mxu0 0.0
          %494 = vmatpush1.msra.mxu0 0.0
          %495 = vmatprep.subr.mxu0 0.0
          %496 = vmatpush1.msra.mxu0 0.0
          %497 = vmatprep.subr.mxu0 0.0
          %498 = vmatpush1.msra.mxu0 0.0
          %499 = vmatprep.subr.mxu0 0.0
          %500 = vmatpush1.msra.mxu0 0.0
          %501 = vmatprep.subr.mxu0 0.0
          %502 = vmatpush1.msra.mxu0 0.0
          %503 = vmatprep.subr.mxu0 0.0
          %504 = vmatpush1.msra.mxu0 0.0
          %505 = vmatprep.subr.mxu0 0.0
          %506 = vmatpush1.msra.mxu0 0.0
          %507 = vmatprep.subr.mxu0 0.0
          %508 = vmatpush1.msra.mxu0 0.0
          %509 = vmatprep.subr.mxu0 0.0
          %510 = vmatpush1.msra.mxu0 0.0
          %511 = vmatprep.subr.mxu0 0.0
          %512 = vmatpush1.msra.mxu0 0.0
          %513 = vmatprep.subr.mxu0 0.0
          %514 = vmatpush1.msra.mxu0 0.0
          %515 = vmatprep.mubr.f32.mxu0 0.0
          %516 = vmatmul.mubr.f32.gmra.mrb[0].mxu0 %v449
          %v517 = vpop.f32.mrb[0].mxu0
          %v518 = vadd.f32 0.0, %v517
          %v519 = vpop.f32.mrb[0].mxu0
          %520 = vdwg.mxu0
          %vm521 = vcmask 130048
          %522 = vst.msk [vmem:[#allocation2] sm:$0xff] %vm521, %v518
          %s523 = sld [smem:[#allocation4 + $0x1]]
          %v524 = vstv %s523
          %v525 = vmul.f32 %v422, %v524
          %s526 = sld [smem:[#allocation7 + $0x1]]
          %v527 = vstv %s526
          %v528 = vadd.f32 %v525, %v527
          %s529 = sld [smem:[#allocation4 + $0x81]]
          %v530 = vstv %s529
          %v531 = vmul.f32 %v424, %v530
          %v532 = vadd.f32 %v528, %v531
          %s533 = sld [smem:[#allocation4 + $0x101]]
          %v534 = vstv %s533
          %v535 = vmul.f32 %v426, %v534
          %v536 = vadd.f32 %v532, %v535
          %s537 = sld [smem:[#allocation4 + $0x181]]
          %v538 = vstv %s537
          %v539 = vmul.f32 %v428, %v538
          %v540 = vadd.f32 %v536, %v539
          %v542 = vsel %vm447, %v540, 0
          %544 = vmatprep.subr.mxu0 0.0
          %545 = vmatpush1.msra.mxu0 %v417
          %546 = vmatprep.subr.mxu0 0.0
          %547 = vmatpush1.msra.mxu0 0.0
          %548 = vmatprep.subr.mxu0 0.0
          %549 = vmatpush1.msra.mxu0 0.0
          %550 = vmatprep.subr.mxu0 0.0
          %551 = vmatpush1.msra.mxu0 0.0
          %552 = vmatprep.subr.mxu0 0.0
          %553 = vmatpush1.msra.mxu0 0.0
          %554 = vmatprep.subr.mxu0 0.0
          %555 = vmatpush1.msra.mxu0 0.0
          %556 = vmatprep.subr.mxu0 0.0
          %557 = vmatpush1.msra.mxu0 0.0
          %558 = vmatprep.subr.mxu0 0.0
          %559 = vmatpush1.msra.mxu0 0.0
          %560 = vmatprep.subr.mxu0 0.0
          %561 = vmatpush1.msra.mxu0 0.0
          %562 = vmatprep.subr.mxu0 0.0
          %563 = vmatpush1.msra.mxu0 0.0
          %564 = vmatprep.subr.mxu0 0.0
          %565 = vmatpush1.msra.mxu0 0.0
          %566 = vmatprep.subr.mxu0 0.0
          %567 = vmatpush1.msra.mxu0 0.0
          %568 = vmatprep.subr.mxu0 0.0
          %569 = vmatpush1.msra.mxu0 0.0
          %570 = vmatprep.subr.mxu0 0.0
          %571 = vmatpush1.msra.mxu0 0.0
          %572 = vmatprep.subr.mxu0 0.0
          %573 = vmatpush1.msra.mxu0 0.0
          %574 = vmatprep.subr.mxu0 0.0
          %575 = vmatpush1.msra.mxu0 0.0
          %576 = vmatprep.subr.mxu0 0.0
          %577 = vmatpush1.msra.mxu0 0.0
          %578 = vmatprep.subr.mxu0 0.0
          %579 = vmatpush1.msra.mxu0 0.0
          %580 = vmatprep.subr.mxu0 0.0
          %581 = vmatpush1.msra.mxu0 0.0
          %582 = vmatprep.subr.mxu0 0.0
          %583 = vmatpush1.msra.mxu0 0.0
          %584 = vmatprep.subr.mxu0 0.0
          %585 = vmatpush1.msra.mxu0 0.0
          %586 = vmatprep.subr.mxu0 0.0
          %587 = vmatpush1.msra.mxu0 0.0
          %588 = vmatprep.subr.mxu0 0.0
          %589 = vmatpush1.msra.mxu0 0.0
          %590 = vmatprep.subr.mxu0 0.0
          %591 = vmatpush1.msra.mxu0 0.0
          %592 = vmatprep.subr.mxu0 0.0
          %593 = vmatpush1.msra.mxu0 0.0
          %594 = vmatprep.subr.mxu0 0.0
          %595 = vmatpush1.msra.mxu0 0.0
          %596 = vmatprep.subr.mxu0 0.0
          %597 = vmatpush1.msra.mxu0 0.0
          %598 = vmatprep.subr.mxu0 0.0
          %599 = vmatpush1.msra.mxu0 0.0
          %600 = vmatprep.subr.mxu0 0.0
          %601 = vmatpush1.msra.mxu0 0.0
          %602 = vmatprep.subr.mxu0 0.0
          %603 = vmatpush1.msra.mxu0 0.0
          %604 = vmatprep.subr.mxu0 0.0
          %605 = vmatpush1.msra.mxu0 0.0
          %606 = vmatprep.subr.mxu0 0.0
          %607 = vmatpush1.msra.mxu0 0.0
          %608 = vmatprep.mubr.f32.mxu0 0.0
          %609 = vmatmul.mubr.f32.gmra.mrb[0].mxu0 %v542
          %v610 = vpop.f32.mrb[0].mxu0
          %v611 = vadd.f32 0.0, %v610
          %v612 = vpop.f32.mrb[0].mxu0
          %613 = vdwg.mxu0
          %615 = vrot.lane.b32.xlu0 %v611, 16
          %v616 = vpop.permute.xlu0 %615
          %vm618 = vcmask 261248
          %619 = vst.msk [vmem:[#allocation2] sm:$0xff] %vm618, %v616
          %s620 = sld [smem:[#allocation4 + $0x2]]
          %v621 = vstv %s620
          %v622 = vmul.f32 %v422, %v621
          %s623 = sld [smem:[#allocation7 + $0x2]]
          %v624 = vstv %s623
          %v625 = vadd.f32 %v622, %v624
          %s626 = sld [smem:[#allocation4 + $0x82]]
          %v627 = vstv %s626
          %v628 = vmul.f32 %v424, %v627
          %v629 = vadd.f32 %v625, %v628
          %s630 = sld [smem:[#allocation4 + $0x102]]
          %v631 = vstv %s630
          %v632 = vmul.f32 %v426, %v631
          %v633 = vadd.f32 %v629, %v632
          %s634 = sld [smem:[#allocation4 + $0x182]]
          %v635 = vstv %s634
          %v636 = vmul.f32 %v428, %v635
          %v637 = vadd.f32 %v633, %v636
          %v639 = vsel %vm447, %v637, 0
          %641 = vmatprep.subr.mxu0 0.0
          %642 = vmatpush1.msra.mxu0 %v417
          %643 = vmatprep.subr.mxu0 0.0
          %644 = vmatpush1.msra.mxu0 0.0
          %645 = vmatprep.subr.mxu0 0.0
          %646 = vmatpush1.msra.mxu0 0.0
          %647 = vmatprep.subr.mxu0 0.0
          %648 = vmatpush1.msra.mxu0 0.0
          %649 = vmatprep.subr.mxu0 0.0
          %650 = vmatpush1.msra.mxu0 0.0
          %651 = vmatprep.subr.mxu0 0.0
          %652 = vmatpush1.msra.mxu0 0.0
          %653 = vmatprep.subr.mxu0 0.0
          %654 = vmatpush1.msra.mxu0 0.0
          %655 = vmatprep.subr.mxu0 0.0
          %656 = vmatpush1.msra.mxu0 0.0
          %657 = vmatprep.subr.mxu0 0.0
          %658 = vmatpush1.msra.mxu0 0.0
          %659 = vmatprep.subr.mxu0 0.0
          %660 = vmatpush1.msra.mxu0 0.0
          %661 = vmatprep.subr.mxu0 0.0
          %662 = vmatpush1.msra.mxu0 0.0
          %663 = vmatprep.subr.mxu0 0.0
          %664 = vmatpush1.msra.mxu0 0.0
          %665 = vmatprep.subr.mxu0 0.0
          %666 = vmatpush1.msra.mxu0 0.0
          %667 = vmatprep.subr.mxu0 0.0
          %668 = vmatpush1.msra.mxu0 0.0
          %669 = vmatprep.subr.mxu0 0.0
          %670 = vmatpush1.msra.mxu0 0.0
          %671 = vmatprep.subr.mxu0 0.0
          %672 = vmatpush1.msra.mxu0 0.0
          %673 = vmatprep.subr.mxu0 0.0
          %674 = vmatpush1.msra.mxu0 0.0
          %675 = vmatprep.subr.mxu0 0.0
          %676 = vmatpush1.msra.mxu0 0.0
          %677 = vmatprep.subr.mxu0 0.0
          %678 = vmatpush1.msra.mxu0 0.0
          %679 = vmatprep.subr.mxu0 0.0
          %680 = vmatpush1.msra.mxu0 0.0
          %681 = vmatprep.subr.mxu0 0.0
          %682 = vmatpush1.msra.mxu0 0.0
          %683 = vmatprep.subr.mxu0 0.0
          %684 = vmatpush1.msra.mxu0 0.0
          %685 = vmatprep.subr.mxu0 0.0
          %686 = vmatpush1.msra.mxu0 0.0
          %687 = vmatprep.subr.mxu0 0.0
          %688 = vmatpush1.msra.mxu0 0.0
          %689 = vmatprep.subr.mxu0 0.0
          %690 = vmatpush1.msra.mxu0 0.0
          %691 = vmatprep.subr.mxu0 0.0
          %692 = vmatpush1.msra.mxu0 0.0
          %693 = vmatprep.subr.mxu0 0.0
          %694 = vmatpush1.msra.mxu0 0.0
          %695 = vmatprep.subr.mxu0 0.0
          %696 = vmatpush1.msra.mxu0 0.0
          %697 = vmatprep.subr.mxu0 0.0
          %698 = vmatpush1.msra.mxu0 0.0
          %699 = vmatprep.subr.mxu0 0.0
          %700 = vmatpush1.msra.mxu0 0.0
          %701 = vmatprep.subr.mxu0 0.0
          %702 = vmatpush1.msra.mxu0 0.0
          %703 = vmatprep.subr.mxu0 0.0
          %704 = vmatpush1.msra.mxu0 0.0
          %705 = vmatprep.mubr.f32.mxu0 0.0
          %706 = vmatmul.mubr.f32.gmra.mrb[0].mxu0 %v639
          %v707 = vpop.f32.mrb[0].mxu0
          %v708 = vadd.f32 0.0, %v707
          %v709 = vpop.f32.mrb[0].mxu0
          %710 = vdwg.mxu0
          %712 = vrot.lane.b32.xlu0 %v708, 32
          %v713 = vpop.permute.xlu0 %712
          %vm715 = vcmask 392448
          %716 = vst.msk [vmem:[#allocation2] sm:$0xff] %vm715, %v713
          %s717 = sld [smem:[#allocation4 + $0x3]]
          %v718 = vstv %s717
          %v719 = vmul.f32 %v422, %v718
          %s720 = sld [smem:[#allocation7 + $0x3]]
          %v721 = vstv %s720
          %v722 = vadd.f32 %v719, %v721
          %s723 = sld [smem:[#allocation4 + $0x83]]
          %v724 = vstv %s723
          %v725 = vmul.f32 %v424, %v724
          %v726 = vadd.f32 %v722, %v725
          %s727 = sld [smem:[#allocation4 + $0x103]]
          %v728 = vstv %s727
          %v729 = vmul.f32 %v426, %v728
          %v730 = vadd.f32 %v726, %v729
          %s731 = sld [smem:[#allocation4 + $0x183]]
          %v732 = vstv %s731
          %v733 = vmul.f32 %v428, %v732
          %v734 = vadd.f32 %v730, %v733
          %v736 = vsel %vm447, %v734, 0
          %738 = vmatprep.subr.mxu0 0.0
          %739 = vmatpush1.msra.mxu0 %v417
          %740 = vmatprep.subr.mxu0 0.0
          %741 = vmatpush1.msra.mxu0 0.0
          %742 = vmatprep.subr.mxu0 0.0
          %743 = vmatpush1.msra.mxu0 0.0
          %744 = vmatprep.subr.mxu0 0.0
          %745 = vmatpush1.msra.mxu0 0.0
          %746 = vmatprep.subr.mxu0 0.0
          %747 = vmatpush1.msra.mxu0 0.0
          %748 = vmatprep.subr.mxu0 0.0
          %749 = vmatpush1.msra.mxu0 0.0
          %750 = vmatprep.subr.mxu0 0.0
          %751 = vmatpush1.msra.mxu0 0.0
          %752 = vmatprep.subr.mxu0 0.0
          %753 = vmatpush1.msra.mxu0 0.0
          %754 = vmatprep.subr.mxu0 0.0
          %755 = vmatpush1.msra.mxu0 0.0
          %756 = vmatprep.subr.mxu0 0.0
          %757 = vmatpush1.msra.mxu0 0.0
          %758 = vmatprep.subr.mxu0 0.0
          %759 = vmatpush1.msra.mxu0 0.0
          %760 = vmatprep.subr.mxu0 0.0
          %761 = vmatpush1.msra.mxu0 0.0
          %762 = vmatprep.subr.mxu0 0.0
          %763 = vmatpush1.msra.mxu0 0.0
          %764 = vmatprep.subr.mxu0 0.0
          %765 = vmatpush1.msra.mxu0 0.0
          %766 = vmatprep.subr.mxu0 0.0
          %767 = vmatpush1.msra.mxu0 0.0
          %768 = vmatprep.subr.mxu0 0.0
          %769 = vmatpush1.msra.mxu0 0.0
          %770 = vmatprep.subr.mxu0 0.0
          %771 = vmatpush1.msra.mxu0 0.0
          %772 = vmatprep.subr.mxu0 0.0
          %773 = vmatpush1.msra.mxu0 0.0
          %774 = vmatprep.subr.mxu0 0.0
          %775 = vmatpush1.msra.mxu0 0.0
          %776 = vmatprep.subr.mxu0 0.0
          %777 = vmatpush1.msra.mxu0 0.0
          %778 = vmatprep.subr.mxu0 0.0
          %779 = vmatpush1.msra.mxu0 0.0
          %780 = vmatprep.subr.mxu0 0.0
          %781 = vmatpush1.msra.mxu0 0.0
          %782 = vmatprep.subr.mxu0 0.0
          %783 = vmatpush1.msra.mxu0 0.0
          %784 = vmatprep.subr.mxu0 0.0
          %785 = vmatpush1.msra.mxu0 0.0
          %786 = vmatprep.subr.mxu0 0.0
          %787 = vmatpush1.msra.mxu0 0.0
          %788 = vmatprep.subr.mxu0 0.0
          %789 = vmatpush1.msra.mxu0 0.0
          %790 = vmatprep.subr.mxu0 0.0
          %791 = vmatpush1.msra.mxu0 0.0
          %792 = vmatprep.subr.mxu0 0.0
          %793 = vmatpush1.msra.mxu0 0.0
          %794 = vmatprep.subr.mxu0 0.0
          %795 = vmatpush1.msra.mxu0 0.0
          %796 = vmatprep.subr.mxu0 0.0
          %797 = vmatpush1.msra.mxu0 0.0
          %798 = vmatprep.subr.mxu0 0.0
          %799 = vmatpush1.msra.mxu0 0.0
          %800 = vmatprep.subr.mxu0 0.0
          %801 = vmatpush1.msra.mxu0 0.0
          %802 = vmatprep.mubr.f32.mxu0 0.0
          %803 = vmatmul.mubr.f32.gmra.mrb[0].mxu0 %v736
          %v804 = vpop.f32.mrb[0].mxu0
          %v805 = vadd.f32 0.0, %v804
          %v806 = vpop.f32.mrb[0].mxu0
          %807 = vdwg.mxu0
          %809 = vrot.lane.b32.xlu0 %v805, 48
          %v810 = vpop.permute.xlu0 %809
          %vm812 = vcmask 523648
          %813 = vst.msk [vmem:[#allocation2] sm:$0xff] %vm812, %v810
          %s814 = sld [smem:[#allocation9]]
          %v815 = vstv %s814
          %v816 = vmul.f32 %v422, %v815
          %s817 = sld [smem:[#allocation3]]
          %v818 = vstv %s817
          %v819 = vadd.f32 %v816, %v818
          %s820 = sld [smem:[#allocation9 + $0x1]]
          %v821 = vstv %s820
          %v822 = vmul.f32 %v424, %v821
          %v823 = vadd.f32 %v819, %v822
          %s824 = sld [smem:[#allocation9 + $0x2]]
          %v825 = vstv %s824
          %v826 = vmul.f32 %v426, %v825
          %v827 = vadd.f32 %v823, %v826
          %s828 = sld [smem:[#allocation9 + $0x3]]
          %v829 = vstv %s828
          %v830 = vmul.f32 %v428, %v829
          %v831 = vadd.f32 %v827, %v830
          %v833 = vsel %vm447, %v831, 0
          %835 = vmatprep.subr.mxu0 0.0
          %836 = vmatpush1.msra.mxu0 %v417
          %837 = vmatprep.subr.mxu0 0.0
          %838 = vmatpush1.msra.mxu0 0.0
          %839 = vmatprep.subr.mxu0 0.0
          %840 = vmatpush1.msra.mxu0 0.0
          %841 = vmatprep.subr.mxu0 0.0
          %842 = vmatpush1.msra.mxu0 0.0
          %843 = vmatprep.subr.mxu0 0.0
          %844 = vmatpush1.msra.mxu0 0.0
          %845 = vmatprep.subr.mxu0 0.0
          %846 = vmatpush1.msra.mxu0 0.0
          %847 = vmatprep.subr.mxu0 0.0
          %848 = vmatpush1.msra.mxu0 0.0
          %849 = vmatprep.subr.mxu0 0.0
          %850 = vmatpush1.msra.mxu0 0.0
          %851 = vmatprep.subr.mxu0 0.0
          %852 = vmatpush1.msra.mxu0 0.0
          %853 = vmatprep.subr.mxu0 0.0
          %854 = vmatpush1.msra.mxu0 0.0
          %855 = vmatprep.subr.mxu0 0.0
          %856 = vmatpush1.msra.mxu0 0.0
          %857 = vmatprep.subr.mxu0 0.0
          %858 = vmatpush1.msra.mxu0 0.0
          %859 = vmatprep.subr.mxu0 0.0
          %860 = vmatpush1.msra.mxu0 0.0
          %861 = vmatprep.subr.mxu0 0.0
          %862 = vmatpush1.msra.mxu0 0.0
          %863 = vmatprep.subr.mxu0 0.0
          %864 = vmatpush1.msra.mxu0 0.0
          %865 = vmatprep.subr.mxu0 0.0
          %866 = vmatpush1.msra.mxu0 0.0
          %867 = vmatprep.subr.mxu0 0.0
          %868 = vmatpush1.msra.mxu0 0.0
          %869 = vmatprep.subr.mxu0 0.0
          %870 = vmatpush1.msra.mxu0 0.0
          %871 = vmatprep.subr.mxu0 0.0
          %872 = vmatpush1.msra.mxu0 0.0
          %873 = vmatprep.subr.mxu0 0.0
          %874 = vmatpush1.msra.mxu0 0.0
          %875 = vmatprep.subr.mxu0 0.0
          %876 = vmatpush1.msra.mxu0 0.0
          %877 = vmatprep.subr.mxu0 0.0
          %878 = vmatpush1.msra.mxu0 0.0
          %879 = vmatprep.subr.mxu0 0.0
          %880 = vmatpush1.msra.mxu0 0.0
          %881 = vmatprep.subr.mxu0 0.0
          %882 = vmatpush1.msra.mxu0 0.0
          %883 = vmatprep.subr.mxu0 0.0
          %884 = vmatpush1.msra.mxu0 0.0
          %885 = vmatprep.subr.mxu0 0.0
          %886 = vmatpush1.msra.mxu0 0.0
          %887 = vmatprep.subr.mxu0 0.0
          %888 = vmatpush1.msra.mxu0 0.0
          %889 = vmatprep.subr.mxu0 0.0
          %890 = vmatpush1.msra.mxu0 0.0
          %891 = vmatprep.subr.mxu0 0.0
          %892 = vmatpush1.msra.mxu0 0.0
          %893 = vmatprep.subr.mxu0 0.0
          %894 = vmatpush1.msra.mxu0 0.0
          %895 = vmatprep.subr.mxu0 0.0
          %896 = vmatpush1.msra.mxu0 0.0
          %897 = vmatprep.subr.mxu0 0.0
          %898 = vmatpush1.msra.mxu0 0.0
          %899 = vmatprep.mubr.f32.mxu0 0.0
          %900 = vmatmul.mubr.f32.gmra.mrb[0].mxu0 %v833
          %v901 = vpop.f32.mrb[0].mxu0
          %v902 = vadd.f32 0.0, %v901
          %v903 = vpop.f32.mrb[0].mxu0
          %904 = vdwg.mxu0
          %906 = vrot.lane.b32.xlu0 %v902, 64
          %v907 = vpop.permute.xlu0 %906
          %vm909 = vcmask 654848
          %910 = vst.msk [vmem:[#allocation2] sm:$0xff] %vm909, %v907
          %v912 = vsel %vm447, %v422, 0
          %914 = vmatprep.subr.mxu0 0.0
          %915 = vmatpush1.msra.mxu0 %v417
          %916 = vmatprep.subr.mxu0 0.0
          %917 = vmatpush1.msra.mxu0 0.0
          %918 = vmatprep.subr.mxu0 0.0
          %919 = vmatpush1.msra.mxu0 0.0
          %920 = vmatprep.subr.mxu0 0.0
          %921 = vmatpush1.msra.mxu0 0.0
          %922 = vmatprep.subr.mxu0 0.0
          %923 = vmatpush1.msra.mxu0 0.0
          %924 = vmatprep.subr.mxu0 0.0
          %925 = vmatpush1.msra.mxu0 0.0
          %926 = vmatprep.subr.mxu0 0.0
          %927 = vmatpush1.msra.mxu0 0.0
          %928 = vmatprep.subr.mxu0 0.0
          %929 = vmatpush1.msra.mxu0 0.0
          %930 = vmatprep.subr.mxu0 0.0
          %931 = vmatpush1.msra.mxu0 0.0
          %932 = vmatprep.subr.mxu0 0.0
          %933 = vmatpush1.msra.mxu0 0.0
          %934 = vmatprep.subr.mxu0 0.0
          %935 = vmatpush1.msra.mxu0 0.0
          %936 = vmatprep.subr.mxu0 0.0
          %937 = vmatpush1.msra.mxu0 0.0
          %938 = vmatprep.subr.mxu0 0.0
          %939 = vmatpush1.msra.mxu0 0.0
          %940 = vmatprep.subr.mxu0 0.0
          %941 = vmatpush1.msra.mxu0 0.0
          %942 = vmatprep.subr.mxu0 0.0
          %943 = vmatpush1.msra.mxu0 0.0
          %944 = vmatprep.subr.mxu0 0.0
          %945 = vmatpush1.msra.mxu0 0.0
          %946 = vmatprep.subr.mxu0 0.0
          %947 = vmatpush1.msra.mxu0 0.0
          %948 = vmatprep.subr.mxu0 0.0
          %949 = vmatpush1.msra.mxu0 0.0
          %950 = vmatprep.subr.mxu0 0.0
          %951 = vmatpush1.msra.mxu0 0.0
          %952 = vmatprep.subr.mxu0 0.0
          %953 = vmatpush1.msra.mxu0 0.0
          %954 = vmatprep.subr.mxu0 0.0
          %955 = vmatpush1.msra.mxu0 0.0
          %956 = vmatprep.subr.mxu0 0.0
          %957 = vmatpush1.msra.mxu0 0.0
          %958 = vmatprep.subr.mxu0 0.0
          %959 = vmatpush1.msra.mxu0 0.0
          %960 = vmatprep.subr.mxu0 0.0
          %961 = vmatpush1.msra.mxu0 0.0
          %962 = vmatprep.subr.mxu0 0.0
          %963 = vmatpush1.msra.mxu0 0.0
          %964 = vmatprep.subr.mxu0 0.0
          %965 = vmatpush1.msra.mxu0 0.0
          %966 = vmatprep.subr.mxu0 0.0
          %967 = vmatpush1.msra.mxu0 0.0
          %968 = vmatprep.subr.mxu0 0.0
          %969 = vmatpush1.msra.mxu0 0.0
          %970 = vmatprep.subr.mxu0 0.0
          %971 = vmatpush1.msra.mxu0 0.0
          %972 = vmatprep.subr.mxu0 0.0
          %973 = vmatpush1.msra.mxu0 0.0
          %974 = vmatprep.subr.mxu0 0.0
          %975 = vmatpush1.msra.mxu0 0.0
          %976 = vmatprep.subr.mxu0 0.0
          %977 = vmatpush1.msra.mxu0 0.0
          %978 = vmatprep.mubr.f32.mxu0 0.0
          %979 = vmatmul.mubr.f32.gmra.mrb[0].mxu0 %v912
          %v980 = vpop.f32.mrb[0].mxu0
          %v981 = vadd.f32 0.0, %v980
          %v982 = vpop.f32.mrb[0].mxu0
          %983 = vdwg.mxu0
          %985 = vrot.lane.b32.xlu0 %v981, 80
          %v986 = vpop.permute.xlu0 %985
          %vm988 = vcmask 786048
          %989 = vst.msk [vmem:[#allocation2] sm:$0xff] %vm988, %v986
          %v991 = vsel %vm447, %v424, 0
          %993 = vmatprep.subr.mxu0 0.0
          %994 = vmatpush1.msra.mxu0 %v417
          %995 = vmatprep.subr.mxu0 0.0
          %996 = vmatpush1.msra.mxu0 0.0
          %997 = vmatprep.subr.mxu0 0.0
          %998 = vmatpush1.msra.mxu0 0.0
          %999 = vmatprep.subr.mxu0 0.0
          %1000 = vmatpush1.msra.mxu0 0.0
          %1001 = vmatprep.subr.mxu0 0.0
          %1002 = vmatpush1.msra.mxu0 0.0
          %1003 = vmatprep.subr.mxu0 0.0
          %1004 = vmatpush1.msra.mxu0 0.0
          %1005 = vmatprep.subr.mxu0 0.0
          %1006 = vmatpush1.msra.mxu0 0.0
          %1007 = vmatprep.subr.mxu0 0.0
          %1008 = vmatpush1.msra.mxu0 0.0
          %1009 = vmatprep.subr.mxu0 0.0
          %1010 = vmatpush1.msra.mxu0 0.0
          %1011 = vmatprep.subr.mxu0 0.0
          %1012 = vmatpush1.msra.mxu0 0.0
          %1013 = vmatprep.subr.mxu0 0.0
          %1014 = vmatpush1.msra.mxu0 0.0
          %1015 = vmatprep.subr.mxu0 0.0
          %1016 = vmatpush1.msra.mxu0 0.0
          %1017 = vmatprep.subr.mxu0 0.0
          %1018 = vmatpush1.msra.mxu0 0.0
          %1019 = vmatprep.subr.mxu0 0.0
          %1020 = vmatpush1.msra.mxu0 0.0
          %1021 = vmatprep.subr.mxu0 0.0
          %1022 = vmatpush1.msra.mxu0 0.0
          %1023 = vmatprep.subr.mxu0 0.0
          %1024 = vmatpush1.msra.mxu0 0.0
          %1025 = vmatprep.subr.mxu0 0.0
          %1026 = vmatpush1.msra.mxu0 0.0
          %1027 = vmatprep.subr.mxu0 0.0
          %1028 = vmatpush1.msra.mxu0 0.0
          %1029 = vmatprep.subr.mxu0 0.0
          %1030 = vmatpush1.msra.mxu0 0.0
          %1031 = vmatprep.subr.mxu0 0.0
          %1032 = vmatpush1.msra.mxu0 0.0
          %1033 = vmatprep.subr.mxu0 0.0
          %1034 = vmatpush1.msra.mxu0 0.0
          %1035 = vmatprep.subr.mxu0 0.0
          %1036 = vmatpush1.msra.mxu0 0.0
          %1037 = vmatprep.subr.mxu0 0.0
          %1038 = vmatpush1.msra.mxu0 0.0
          %1039 = vmatprep.subr.mxu0 0.0
          %1040 = vmatpush1.msra.mxu0 0.0
          %1041 = vmatprep.subr.mxu0 0.0
          %1042 = vmatpush1.msra.mxu0 0.0
          %1043 = vmatprep.subr.mxu0 0.0
          %1044 = vmatpush1.msra.mxu0 0.0
          %1045 = vmatprep.subr.mxu0 0.0
          %1046 = vmatpush1.msra.mxu0 0.0
          %1047 = vmatprep.subr.mxu0 0.0
          %1048 = vmatpush1.msra.mxu0 0.0
          %1049 = vmatprep.subr.mxu0 0.0
          %1050 = vmatpush1.msra.mxu0 0.0
          %1051 = vmatprep.subr.mxu0 0.0
          %1052 = vmatpush1.msra.mxu0 0.0
          %1053 = vmatprep.subr.mxu0 0.0
          %1054 = vmatpush1.msra.mxu0 0.0
          %1055 = vmatprep.subr.mxu0 0.0
          %1056 = vmatpush1.msra.mxu0 0.0
          %1057 = vmatprep.mubr.f32.mxu0 0.0
          %1058 = vmatmul.mubr.f32.gmra.mrb[0].mxu0 %v991
          %v1059 = vpop.f32.mrb[0].mxu0
          %v1060 = vadd.f32 0.0, %v1059
          %v1061 = vpop.f32.mrb[0].mxu0
          %1062 = vdwg.mxu0
          %1064 = vrot.lane.b32.xlu0 %v1060, 96
          %v1065 = vpop.permute.xlu0 %1064
          %vm1067 = vcmask 917248
          %1068 = vst.msk [vmem:[#allocation2] sm:$0xff] %vm1067, %v1065
          %v1070 = vsel %vm447, %v426, 0
          %1072 = vmatprep.subr.mxu0 0.0
          %1073 = vmatpush1.msra.mxu0 %v417
          %1074 = vmatprep.subr.mxu0 0.0
          %1075 = vmatpush1.msra.mxu0 0.0
          %1076 = vmatprep.subr.mxu0 0.0
          %1077 = vmatpush1.msra.mxu0 0.0
          %1078 = vmatprep.subr.mxu0 0.0
          %1079 = vmatpush1.msra.mxu0 0.0
          %1080 = vmatprep.subr.mxu0 0.0
          %1081 = vmatpush1.msra.mxu0 0.0
          %1082 = vmatprep.subr.mxu0 0.0
          %1083 = vmatpush1.msra.mxu0 0.0
          %1084 = vmatprep.subr.mxu0 0.0
          %1085 = vmatpush1.msra.mxu0 0.0
          %1086 = vmatprep.subr.mxu0 0.0
          %1087 = vmatpush1.msra.mxu0 0.0
          %1088 = vmatprep.subr.mxu0 0.0
          %1089 = vmatpush1.msra.mxu0 0.0
          %1090 = vmatprep.subr.mxu0 0.0
          %1091 = vmatpush1.msra.mxu0 0.0
          %1092 = vmatprep.subr.mxu0 0.0
          %1093 = vmatpush1.msra.mxu0 0.0
          %1094 = vmatprep.subr.mxu0 0.0
          %1095 = vmatpush1.msra.mxu0 0.0
          %1096 = vmatprep.subr.mxu0 0.0
          %1097 = vmatpush1.msra.mxu0 0.0
          %1098 = vmatprep.subr.mxu0 0.0
          %1099 = vmatpush1.msra.mxu0 0.0
          %1100 = vmatprep.subr.mxu0 0.0
          %1101 = vmatpush1.msra.mxu0 0.0
          %1102 = vmatprep.subr.mxu0 0.0
          %1103 = vmatpush1.msra.mxu0 0.0
          %1104 = vmatprep.subr.mxu0 0.0
          %1105 = vmatpush1.msra.mxu0 0.0
          %1106 = vmatprep.subr.mxu0 0.0
          %1107 = vmatpush1.msra.mxu0 0.0
          %1108 = vmatprep.subr.mxu0 0.0
          %1109 = vmatpush1.msra.mxu0 0.0
          %1110 = vmatprep.subr.mxu0 0.0
          %1111 = vmatpush1.msra.mxu0 0.0
          %1112 = vmatprep.subr.mxu0 0.0
          %1113 = vmatpush1.msra.mxu0 0.0
          %1114 = vmatprep.subr.mxu0 0.0
          %1115 = vmatpush1.msra.mxu0 0.0
          %1116 = vmatprep.subr.mxu0 0.0
          %1117 = vmatpush1.msra.mxu0 0.0
          %1118 = vmatprep.subr.mxu0 0.0
          %1119 = vmatpush1.msra.mxu0 0.0
          %1120 = vmatprep.subr.mxu0 0.0
          %1121 = vmatpush1.msra.mxu0 0.0
          %1122 = vmatprep.subr.mxu0 0.0
          %1123 = vmatpush1.msra.mxu0 0.0
          %1124 = vmatprep.subr.mxu0 0.0
          %1125 = vmatpush1.msra.mxu0 0.0
          %1126 = vmatprep.subr.mxu0 0.0
          %1127 = vmatpush1.msra.mxu0 0.0
          %1128 = vmatprep.subr.mxu0 0.0
          %1129 = vmatpush1.msra.mxu0 0.0
          %1130 = vmatprep.subr.mxu0 0.0
          %1131 = vmatpush1.msra.mxu0 0.0
          %1132 = vmatprep.subr.mxu0 0.0
          %1133 = vmatpush1.msra.mxu0 0.0
          %1134 = vmatprep.subr.mxu0 0.0
          %1135 = vmatpush1.msra.mxu0 0.0
          %1136 = vmatprep.mubr.f32.mxu0 0.0
          %1137 = vmatmul.mubr.f32.gmra.mrb[0].mxu0 %v1070
          %v1138 = vpop.f32.mrb[0].mxu0
          %v1139 = vadd.f32 0.0, %v1138
          %v1140 = vpop.f32.mrb[0].mxu0
          %1141 = vdwg.mxu0
          %1143 = vrot.lane.b32.xlu0 %v1139, 112
          %v1144 = vpop.permute.xlu0 %1143
          %vm1146 = vcmask 1048448
          %1147 = vst.msk [vmem:[#allocation2] sm:$0xff] %vm1146, %v1144
          %v1149 = vsel %vm447, %v428, 0
          %1151 = vmatprep.subr.mxu0 0.0
          %1152 = vmatpush1.msra.mxu0 %v417
          %1153 = vmatprep.subr.mxu0 0.0
          %1154 = vmatpush1.msra.mxu0 0.0
          %1155 = vmatprep.subr.mxu0 0.0
          %1156 = vmatpush1.msra.mxu0 0.0
          %1157 = vmatprep.subr.mxu0 0.0
          %1158 = vmatpush1.msra.mxu0 0.0
          %1159 = vmatprep.subr.mxu0 0.0
          %1160 = vmatpush1.msra.mxu0 0.0
          %1161 = vmatprep.subr.mxu0 0.0
          %1162 = vmatpush1.msra.mxu0 0.0
          %1163 = vmatprep.subr.mxu0 0.0
          %1164 = vmatpush1.msra.mxu0 0.0
          %1165 = vmatprep.subr.mxu0 0.0
          %1166 = vmatpush1.msra.mxu0 0.0
          %1167 = vmatprep.subr.mxu0 0.0
          %1168 = vmatpush1.msra.mxu0 0.0
          %1169 = vmatprep.subr.mxu0 0.0
          %1170 = vmatpush1.msra.mxu0 0.0
          %1171 = vmatprep.subr.mxu0 0.0
          %1172 = vmatpush1.msra.mxu0 0.0
          %1173 = vmatprep.subr.mxu0 0.0
          %1174 = vmatpush1.msra.mxu0 0.0
          %1175 = vmatprep.subr.mxu0 0.0
          %1176 = vmatpush1.msra.mxu0 0.0
          %1177 = vmatprep.subr.mxu0 0.0
          %1178 = vmatpush1.msra.mxu0 0.0
          %1179 = vmatprep.subr.mxu0 0.0
          %1180 = vmatpush1.msra.mxu0 0.0
          %1181 = vmatprep.subr.mxu0 0.0
          %1182 = vmatpush1.msra.mxu0 0.0
          %1183 = vmatprep.subr.mxu0 0.0
          %1184 = vmatpush1.msra.mxu0 0.0
          %1185 = vmatprep.subr.mxu0 0.0
          %1186 = vmatpush1.msra.mxu0 0.0
          %1187 = vmatprep.subr.mxu0 0.0
          %1188 = vmatpush1.msra.mxu0 0.0
          %1189 = vmatprep.subr.mxu0 0.0
          %1190 = vmatpush1.msra.mxu0 0.0
          %1191 = vmatprep.subr.mxu0 0.0
          %1192 = vmatpush1.msra.mxu0 0.0
          %1193 = vmatprep.subr.mxu0 0.0
          %1194 = vmatpush1.msra.mxu0 0.0
          %1195 = vmatprep.subr.mxu0 0.0
          %1196 = vmatpush1.msra.mxu0 0.0
          %1197 = vmatprep.subr.mxu0 0.0
          %1198 = vmatpush1.msra.mxu0 0.0
          %1199 = vmatprep.subr.mxu0 0.0
          %1200 = vmatpush1.msra.mxu0 0.0
          %1201 = vmatprep.subr.mxu0 0.0
          %1202 = vmatpush1.msra.mxu0 0.0
          %1203 = vmatprep.subr.mxu0 0.0
          %1204 = vmatpush1.msra.mxu0 0.0
          %1205 = vmatprep.subr.mxu0 0.0
          %1206 = vmatpush1.msra.mxu0 0.0
          %1207 = vmatprep.subr.mxu0 0.0
          %1208 = vmatpush1.msra.mxu0 0.0
          %1209 = vmatprep.subr.mxu0 0.0
          %1210 = vmatpush1.msra.mxu0 0.0
          %1211 = vmatprep.subr.mxu0 0.0
          %1212 = vmatpush1.msra.mxu0 0.0
          %1213 = vmatprep.subr.mxu0 0.0
          %1214 = vmatpush1.msra.mxu0 0.0
          %1215 = vmatprep.mubr.f32.mxu0 0.0
          %1216 = vmatmul.mubr.f32.gmra.mrb[0].mxu0 %v1149
          %v1217 = vpop.f32.mrb[0].mxu0
          %v1218 = vadd.f32 0.0, %v1217
          %v1219 = vpop.f32.mrb[0].mxu0
          %1220 = vdwg.mxu0
          %1221 = vst.msk [vmem:[#allocation2 + $0x8] sm:$0xff] %vm521, %v1218
        $region68: #{pagfm_forward.1} parent=51 // pred_fallthru
          _
        %v1222 = vld [vmem:[%s414] sm:$0xff]
        %v1223 = vld [vmem:[%s414 + $0x8] sm:$0xff]
        %v1224 = vld [vmem:[#allocation2] sm:$0xff]
        %v1225 = vld [vmem:[#allocation2 + $0x8] sm:$0xff]
        %vm1226 = vcmask 64512
        %v1228 = vsel %vm1226, %v1222, 0
        %v1231 = vsel %vm1226, %v1223, 0
        %1233 = vmatprep.subr.mxu0 %v1225
        %1234 = vmatpush1.msra.mxu0 %v1224
        %1235 = vmatprep.subr.mxu0 0.0
        %1236 = vmatpush1.msra.mxu0 0.0
        %1237 = vmatprep.subr.mxu0 0.0
        %1238 = vmatpush1.msra.mxu0 0.0
        %1239 = vmatprep.subr.mxu0 0.0
        %1240 = vmatpush1.msra.mxu0 0.0
        %1241 = vmatprep.subr.mxu0 0.0
        %1242 = vmatpush1.msra.mxu0 0.0
        %1243 = vmatprep.subr.mxu0 0.0
        %1244 = vmatpush1.msra.mxu0 0.0
        %1245 = vmatprep.subr.mxu0 0.0
        %1246 = vmatpush1.msra.mxu0 0.0
        %1247 = vmatprep.subr.mxu0 0.0
        %1248 = vmatpush1.msra.mxu0 0.0
        %1249 = vmatprep.subr.mxu0 0.0
        %1250 = vmatpush1.msra.mxu0 0.0
        %1251 = vmatprep.subr.mxu0 0.0
        %1252 = vmatpush1.msra.mxu0 0.0
        %1253 = vmatprep.subr.mxu0 0.0
        %1254 = vmatpush1.msra.mxu0 0.0
        %1255 = vmatprep.subr.mxu0 0.0
        %1256 = vmatpush1.msra.mxu0 0.0
        %1257 = vmatprep.subr.mxu0 0.0
        %1258 = vmatpush1.msra.mxu0 0.0
        %1259 = vmatprep.subr.mxu0 0.0
        %1260 = vmatpush1.msra.mxu0 0.0
        %1261 = vmatprep.subr.mxu0 0.0
        %1262 = vmatpush1.msra.mxu0 0.0
        %1263 = vmatprep.subr.mxu0 0.0
        %1264 = vmatpush1.msra.mxu0 0.0
        %1265 = vmatprep.subr.mxu0 0.0
        %1266 = vmatpush1.msra.mxu0 0.0
        %1267 = vmatprep.subr.mxu0 0.0
        %1268 = vmatpush1.msra.mxu0 0.0
        %1269 = vmatprep.subr.mxu0 0.0
        %1270 = vmatpush1.msra.mxu0 0.0
        %1271 = vmatprep.subr.mxu0 0.0
        %1272 = vmatpush1.msra.mxu0 0.0
        %1273 = vmatprep.subr.mxu0 0.0
        %1274 = vmatpush1.msra.mxu0 0.0
        %1275 = vmatprep.subr.mxu0 0.0
        %1276 = vmatpush1.msra.mxu0 0.0
        %1277 = vmatprep.subr.mxu0 0.0
        %1278 = vmatpush1.msra.mxu0 0.0
        %1279 = vmatprep.subr.mxu0 0.0
        %1280 = vmatpush1.msra.mxu0 0.0
        %1281 = vmatprep.subr.mxu0 0.0
        %1282 = vmatpush1.msra.mxu0 0.0
        %1283 = vmatprep.subr.mxu0 0.0
        %1284 = vmatpush1.msra.mxu0 0.0
        %1285 = vmatprep.subr.mxu0 0.0
        %1286 = vmatpush1.msra.mxu0 0.0
        %1287 = vmatprep.subr.mxu0 0.0
        %1288 = vmatpush1.msra.mxu0 0.0
        %1289 = vmatprep.subr.mxu0 0.0
        %1290 = vmatpush1.msra.mxu0 0.0
        %1291 = vmatprep.subr.mxu0 0.0
        %1292 = vmatpush1.msra.mxu0 0.0
        %1293 = vmatprep.subr.mxu0 0.0
        %1294 = vmatpush1.msra.mxu0 0.0
        %1295 = vmatprep.subr.mxu0 0.0
        %1296 = vmatpush1.msra.mxu0 0.0
        %1297 = vmatprep.mubr.f32.mxu0 0.0
        %1298 = vmatmul.mubr.f32.gmra.mrb[0].mxu0 %v1228
        %v1299 = vpop.f32.mrb[0].mxu0
        %v1300 = vadd.f32 0.0, %v1299
        %v1301 = vpop.f32.mrb[0].mxu0
        %v1302 = vadd.f32 0.0, %v1301
        %1303 = vmatprep.mubr.f32.mxu0 0.0
        %1304 = vmatmul.mubr.f32.gmra.mrb[0].mxu0 %v1231
        %v1305 = vpop.f32.mrb[0].mxu0
        %v1306 = vadd.f32 0.0, %v1305
        %v1307 = vpop.f32.mrb[0].mxu0
        %v1308 = vadd.f32 0.0, %v1307
        %1309 = vdwg.mxu0
        %v1310 = vld [vmem:[%s403] sm:$0xff]
        %v1311 = vld [vmem:[%s403 + $0x8] sm:$0xff]
        %s1312 = scalar_lea.vmem %s403, 16
        %v1313 = vld [vmem:[%s1312] sm:$0xff]
        %v1314 = vld [vmem:[%s1312 + $0x8] sm:$0xff]
        %s1315 = scalar_lea.vmem %s403, 32
        %v1316 = vld [vmem:[%s1315] sm:$0xff]
        %v1317 = vld [vmem:[%s1315 + $0x8] sm:$0xff]
        %s1318 = scalar_lea.vmem %s403, 48
        %v1319 = vld [vmem:[%s1318] sm:$0xff]
        %v1320 = vld [vmem:[%s1318 + $0x8] sm:$0xff]
        %v1321 = vmul.f32 %v1310, %v1300
        %v1322 = vmul.f32 %v1311, %v1306
        %1325 = vrot.lane.b32.xlu0 %v1321, 64
        %v1326 = vpop.permute.xlu0 %1325
        %1327 = vrot.lane.b32.xlu0 %v1322, 64
        %v1328 = vpop.permute.xlu0 %1327
        %v1331 = vadd.f32 %v1300, %v1326
        %v1332 = vadd.f32 %v1306, %v1328
        %1335 = vrot.lane.b32.xlu0 %v1300, 112
        %v1336 = vpop.permute.xlu0 %1335
        %1337 = vrot.lane.b32.xlu0 %v1306, 112
        %v1338 = vpop.permute.xlu0 %1337
        %v1341 = vmul.f32 %v1313, %v1336
        %v1342 = vmul.f32 %v1314, %v1338
        %1345 = vrot.lane.b32.xlu0 %v1341, 64
        %v1346 = vpop.permute.xlu0 %1345
        %1347 = vrot.lane.b32.xlu0 %v1342, 64
        %v1348 = vpop.permute.xlu0 %1347
        %v1351 = vadd.f32 %v1331, %v1346
        %v1352 = vadd.f32 %v1332, %v1348
        %1353 = vrot.lane.b32.xlu0 %v1300, 96
        %v1354 = vpop.permute.xlu0 %1353
        %1355 = vrot.lane.b32.xlu0 %v1306, 96
        %v1356 = vpop.permute.xlu0 %1355
        %v1359 = vmul.f32 %v1316, %v1354
        %v1360 = vmul.f32 %v1317, %v1356
        %1363 = vrot.lane.b32.xlu0 %v1359, 64
        %v1364 = vpop.permute.xlu0 %1363
        %1365 = vrot.lane.b32.xlu0 %v1360, 64
        %v1366 = vpop.permute.xlu0 %1365
        %v1369 = vadd.f32 %v1351, %v1364
        %v1370 = vadd.f32 %v1352, %v1366
        %1371 = vrot.lane.b32.xlu0 %v1300, 80
        %v1372 = vpop.permute.xlu0 %1371
        %1373 = vrot.lane.b32.xlu0 %v1306, 80
        %v1374 = vpop.permute.xlu0 %1373
        %v1377 = vmul.f32 %v1319, %v1372
        %v1378 = vmul.f32 %v1320, %v1374
        %1381 = vrot.lane.b32.xlu0 %v1377, 64
        %v1382 = vpop.permute.xlu0 %1381
        %1383 = vrot.lane.b32.xlu0 %v1378, 64
        %v1384 = vpop.permute.xlu0 %1383
        %v1387 = vadd.f32 %v1369, %v1382
        %v1388 = vadd.f32 %v1370, %v1384
        %v1389 = vxor.u32 %v1387, 2147483648
        %v1390 = vxor.u32 %v1388, 2147483648
        %v1391 = vmul.f32 %v1389, 1.442695
        %v1392 = vpow.pop %v1391
        %v1393 = vmul.f32 %v1390, 1.442695
        %v1394 = vpow.pop %v1393
        %v1395 = vadd.f32 %v1392, 1.0
        %v1396 = vadd.f32 %v1394, 1.0
        %v1397 = vrcp.pop %v1395
        %v1398 = vmul.f32 1.0, %v1397
        %v1399 = vrcp.pop %v1396
        %v1400 = vmul.f32 1.0, %v1399
        %v1401 = vsub.f32 1.0, %v1398
        %v1402 = vsub.f32 1.0, %v1400
        %1405 = vrot.lane.b32.xlu0 %v1310, 64
        %v1406 = vpop.permute.xlu0 %1405
        %1407 = vrot.lane.b32.xlu0 %v1311, 64
        %v1408 = vpop.permute.xlu0 %1407
        %v1411 = vmul.f32 %v1401, %v1406
        %v1412 = vmul.f32 %v1402, %v1408
        %v1413 = vmul.f32 %v1398, %v1336
        %v1414 = vmul.f32 %v1400, %v1338
        %v1415 = vadd.f32 %v1411, %v1413
        %v1416 = vadd.f32 %v1412, %v1414
        %1419 = vrot.lane.b32.xlu0 %v1415, 64
        %v1420 = vpop.permute.xlu0 %1419
        %1421 = vrot.lane.b32.xlu0 %v1416, 64
        %v1422 = vpop.permute.xlu0 %1421
        %vm1425 = vcmask 130048
        %1426 = vst.msk [vmem:[%s394] sm:$0xff] %vm1425, %v1420
        %1427 = vst.msk [vmem:[%s394 + $0x8] sm:$0xff] %vm1425, %v1422
        %1430 = vrot.lane.b32.xlu0 %v1313, 64
        %v1431 = vpop.permute.xlu0 %1430
        %1432 = vrot.lane.b32.xlu0 %v1314, 64
        %v1433 = vpop.permute.xlu0 %1432
        %v1436 = vmul.f32 %v1401, %v1431
        %v1437 = vmul.f32 %v1402, %v1433
        %v1438 = vmul.f32 %v1398, %v1354
        %v1439 = vmul.f32 %v1400, %v1356
        %v1440 = vadd.f32 %v1436, %v1438
        %v1441 = vadd.f32 %v1437, %v1439
        %1444 = vrot.lane.b32.xlu0 %v1440, 64
        %v1445 = vpop.permute.xlu0 %1444
        %1446 = vrot.lane.b32.xlu0 %v1441, 64
        %v1447 = vpop.permute.xlu0 %1446
        %s1450 = scalar_lea.vmem %s394, 16 [#allocation10]
        %1451 = vst.msk [vmem:[%s1450] sm:$0xff] %vm1425, %v1445
        %1452 = vst.msk [vmem:[%s1450 + $0x8] sm:$0xff] %vm1425, %v1447
        %1455 = vrot.lane.b32.xlu0 %v1316, 64
        %v1456 = vpop.permute.xlu0 %1455
        %1457 = vrot.lane.b32.xlu0 %v1317, 64
        %v1458 = vpop.permute.xlu0 %1457
        %v1461 = vmul.f32 %v1401, %v1456
        %v1462 = vmul.f32 %v1402, %v1458
        %v1463 = vmul.f32 %v1398, %v1372
        %v1464 = vmul.f32 %v1400, %v1374
        %v1465 = vadd.f32 %v1461, %v1463
        %v1466 = vadd.f32 %v1462, %v1464
        %1469 = vrot.lane.b32.xlu0 %v1465, 64
        %v1470 = vpop.permute.xlu0 %1469
        %1471 = vrot.lane.b32.xlu0 %v1466, 64
        %v1472 = vpop.permute.xlu0 %1471
        %s1475 = scalar_lea.vmem %s394, 32 [#allocation10]
        %1476 = vst.msk [vmem:[%s1475] sm:$0xff] %vm1425, %v1470
        %1477 = vst.msk [vmem:[%s1475 + $0x8] sm:$0xff] %vm1425, %v1472
        %1480 = vrot.lane.b32.xlu0 %v1319, 64
        %v1481 = vpop.permute.xlu0 %1480
        %1482 = vrot.lane.b32.xlu0 %v1320, 64
        %v1483 = vpop.permute.xlu0 %1482
        %v1486 = vmul.f32 %v1401, %v1481
        %v1487 = vmul.f32 %v1402, %v1483
        %1490 = vrot.lane.b32.xlu0 %v1302, 64
        %v1491 = vpop.permute.xlu0 %1490
        %1492 = vrot.lane.b32.xlu0 %v1308, 64
        %v1493 = vpop.permute.xlu0 %1492
        %v1496 = vmul.f32 %v1398, %v1491
        %v1497 = vmul.f32 %v1400, %v1493
        %v1498 = vadd.f32 %v1486, %v1496
        %v1499 = vadd.f32 %v1487, %v1497
        %1502 = vrot.lane.b32.xlu0 %v1498, 64
        %v1503 = vpop.permute.xlu0 %1502
        %1504 = vrot.lane.b32.xlu0 %v1499, 64
        %v1505 = vpop.permute.xlu0 %1504
        %s1508 = scalar_lea.vmem %s394, 48 [#allocation10]
        %1509 = vst.msk [vmem:[%s1508] sm:$0xff] %vm1425, %v1503
        %1510 = vst.msk [vmem:[%s1508 + $0x8] sm:$0xff] %vm1425, %v1505
        %s1511 = sand.u32 %s232, 1
        %s1512 = scalar_lea.sflag [#allocation5], %s1511
        %s1513 = sand.u32 %s232, 1
        %s1514 = smul.addr %s1513, 64
        %s1515 = scalar_lea.vmem [#allocation10], %s1514
        // Predicated region
        $region69: #{pagfm_forward.1} parent=51 // pred_check
          %p1516 = pneg %p242
        $region70: #{pagfm_forward.1} parent=51 // pred_check_branch
          %1518 = sbr.rel (%p1516) target = $region72
        $region71: #{pagfm_forward.1} parent=51 // pred_region
          %s1519 = smul.u32 2, %s30
          %s1521 = ssub.s32 1024, 1024
          %1522 = vsyncadd %s1512, %s1521
          %s1523 = smul.addr %s29, 8
          %s1524 = sadd.s32 %s1519, %s1523
          %s1525 = smul.addr %s1524, 128
          %s1526 = scalar_lea.hbm %s8, %s1525
          %s1527 = sshll.u32 %s1515, 4
          %s1528 = int_to_ptr.vmem [resolvable:$true] %s1527
          %1533 = dma.vmem_to_hbm [thread:$0]  %s1528, 1024, %s1526, %s1512, 128, 128, 8
        $region72: #{pagfm_forward.1} parent=51 // pred_fallthru
          _
      $region52: #{pagfm_forward.1} parent=5 // pred_fallthru
        _
      %p1534 = scmp.le.s32.totalorder 2, %s20
      // Predicated region
      $region73: #{pagfm_forward.1} parent=5 // pred_check
        %p1535 = pneg %p1534
      $region74: #{pagfm_forward.1} parent=5 // pred_check_branch
        %1537 = sbr.rel (%p1535) target = $region76
      $region75: #{pagfm_forward.1} parent=5 // pred_region
        %s1538 = ssub.s32 %s20, 2
        // Predicated region
        $region77: #{pagfm_forward.1} parent=75 // pred_check
          %p1539 = pneg %p248
        $region78: #{pagfm_forward.1} parent=75 // pred_check_branch
          %1541 = sbr.rel (%p1539) target = $region80
        $region79: #{pagfm_forward.1} parent=75 // pred_region
          %s1542 = sand.u32 %s233, 1
          %s1543 = scalar_lea.sflag [#allocation5], %s1542
          %s1544 = sand.u32 %s233, 1
          %s1545 = smul.addr %s1544, 64
          %s1546 = scalar_lea.vmem [#allocation10], %s1545
          %1547 = dma.done %s1543, 1024
        $region80: #{pagfm_forward.1} parent=75 // pred_fallthru
          _
      $region76: #{pagfm_forward.1} parent=5 // pred_fallthru
        _
    $region6: #{pagfm_forward.1} parent=1 // loop_footer
      %s24 = sadd.s32 1, %s20
    $region7: #{pagfm_forward.1} parent=1 // loop_footer_branch
      %19 = sbr.rel target = $region3
    $region8: #{pagfm_forward.1} parent=1 // loop_exit
      _
    %1548 = vsyncpa [#allocation5], 1
    %s1549 = scalar_lea.sflag [#allocation5], 1
    %1550 = vsyncpa %s1549, 1
    %1551 = vsyncpa [#allocation6], 1
    %s1552 = scalar_lea.sflag [#allocation6], 1
    %1553 = vsyncpa %s1552, 1
    %1554 = vsyncpa [#allocation8], 1

</llo_original>
